<compile_context>
chip_gen: v7x
topology: tpu7x:2x2x1
jax: 0.10.0
libtpu: 0.0.40
codegen_flags: <defaults>
</compile_context>

<pallas_src>
import functools

import jax
import jax.numpy as jnp
from jax.experimental import pallas as pl
from jax.experimental.pallas import tpu as pltpu


def _residual_block_kernel(K, approx_mish,
                           xp_ref, emb_ref, w1_ref, w2_ref, vec_ref, gmat_ref,
                           o_ref, hpad_ref):
    Bb, Tp, Cin = xp_ref.shape
    Cout = o_ref.shape[-1]
    pad = K // 2
    T = Tp - 2 * pad
    M = Bb * T
    eps = 1e-5

    gmat = gmat_ref[...]                        # (C, C) group membership / (T*cpg)

    # packed per-channel vectors: one (8, Cout) tile, row-sliced here
    b1, g1w, g1b = vec_ref[0:1, :], vec_ref[1:2, :], vec_ref[2:3, :]
    b2, g2w, g2b = vec_ref[3:4, :], vec_ref[4:5, :], vec_ref[5:6, :]
    rb = vec_ref[6:7, :]

    def mish(v):
        # x * tanh(softplus(x)) == x * (u^2 + 2u) / (u^2 + 2u + 2), u = exp(x)
        # -> one EUP transcendental + one EUP reciprocal; the clamp keeps the
        #    large-x passthrough exact and avoids inf/inf.
        u = jnp.exp(jnp.minimum(v, 20.0))
        w = u * (u + 2.0)
        return v * w * pl.reciprocal(w + 2.0, approx=approx_mish)

    def group_norm(h3, gamma, beta):
        # Per-batch GroupNorm over (T, channels-in-group).  The T-reduction is
        # a sublane (XLU) sum -- the XLU is otherwise idle -- and the group
        # averaging is a tiny MXU matmul with gmat.  Mean/var fused into one
        # pass: var = E[h^2] - mean^2 (guarded against tiny negative values).
        s1 = jnp.sum(h3, axis=1)                                     # (Bb, C)
        s2 = jnp.sum(h3 * h3, axis=1)                                # (Bb, C)
        mu = jnp.dot(s1, gmat, preferred_element_type=jnp.float32)   # (Bb, C)
        msq = jnp.dot(s2, gmat, preferred_element_type=jnp.float32)  # (Bb, C)
        var = jnp.maximum(msq - mu * mu, 0.0)
        inv = jax.lax.rsqrt(var + eps)
        return ((h3 - mu.reshape(Bb, 1, Cout)) * inv.reshape(Bb, 1, Cout)
                * gamma + beta)

    # dominant input arrives in compute_dtype (bf16 by default); all in-kernel
    # math stays f32 (v5e-safe VPU/EUP, f32 accumulation everywhere).
    xp = xp_ref[...].astype(jnp.float32)                    # (Bb, Tp, Cin)

    # ---- Conv1dBlock 0 + folded residual 1x1: K shifted-slice matmuls into
    #      one running accumulator producing (M, 2*Cout) = [h | res].
    acc = None
    for k in range(K):
        op = xp[:, k:k + T, :].reshape(M, Cin)
        part = jnp.dot(op, w1_ref[k], preferred_element_type=jnp.float32)
        acc = part if acc is None else acc + part
    h = acc[:, :Cout] + b1                                   # conv1 + bias
    res = acc[:, Cout:] + rb                                 # residual path
    h = mish(group_norm(h.reshape(Bb, T, Cout), g1w, g1b))   # (Bb, T, C)

    # ---- time embedding (Linear(Mish(t)) hoisted to the wrapper) ----
    h = h + emb_ref[...]                                     # (Bb, 1, C) bcast

    # ---- Conv1dBlock 1: time-padded h in a persistent VMEM scratch ----
    # TODO(synk): replace with pltpu.roll + edge masks to drop this VMEM
    # store/load round trip once validated on the target jax/Mosaic version.
    hpad_ref[:, pad:pad + T, :] = h
    edge = jnp.zeros((Bb, pad, Cout), jnp.float32)
    hpad_ref[:, 0:pad, :] = edge            # re-zero each step: megacore-safe
    hpad_ref[:, pad + T:, :] = edge

    hp = hpad_ref[...]                                        # (Bb, Tp, C)
    acc2 = None
    for k in range(K):
        op = hp[:, k:k + T, :].reshape(M, Cout)
        part = jnp.dot(op, w2_ref[k], preferred_element_type=jnp.float32)
        acc2 = part if acc2 is None else acc2 + part
    h2 = mish(group_norm((acc2 + b2).reshape(Bb, T, Cout), g2w, g2b))

    # TODO(synk): a lane-dense (Bb, T*Cout) slab store (or an in-kernel
    # transpose to NCT) would avoid masked vst's when Cout < 128; needs a
    # minor-dims relayout -- kept the proven layout here.
    o_ref[...] = (h2 + res.reshape(Bb, T, Cout)).astype(o_ref.dtype)


def _tpu_info():
    """Best-effort (per-core VMEM bytes, TensorCores per chip); safe fallbacks."""
    vmem_cap = 128 * 1024 * 1024
    cores = 1
    try:
        info = pltpu.get_tpu_info()
        v = getattr(info, "vmem_capacity_bytes", None)
        if isinstance(v, int) and v > 0:
            vmem_cap = v
        for name in ("tensorcores_per_chip", "num_tensorcores", "num_cores",
                     "cores_per_chip", "core_count"):
            c = getattr(info, name, None)
            if isinstance(c, int) and c > 0:
                cores = c
                break
    except Exception:
        pass
    return vmem_cap, cores


def _pick_batch_block(B, T, per_b_bytes, const_bytes, vmem_budget, min_steps,
                      target_rows=1024):
    """Largest divisor of B with Bb*T ~<= target_rows, honoring a minimum grid
    step count (only on multi-TensorCore chips) and the VMEM budget."""
    bb = max(1, min(B, max(1, target_rows // max(T, 1))))
    if min_steps > 1 and B >= min_steps:
        bb = min(bb, max(1, B // min_steps))
    while B % bb:
        bb -= 1
    while bb > 1 and bb * per_b_bytes + const_bytes > vmem_budget:
        bb -= 1
        while B % bb:
            bb -= 1
    return bb


def residual_block_forward(x, t, params, n_groups=8, batch_block=None,
                           compute_dtype=jnp.bfloat16, approx_mish=True):
    """x: (B, Cin, T) NCT, t: (B, E). Returns (B, Cout, T), like the PyTorch module."""
    (w1, b1, g1w, g1b, w2, b2, g2w, g2b, lw, lb, rw, rb) = params
    B, Cin, T = x.shape
    Cout, _, K = w1.shape
    pad = K // 2
    Tp = T + 2 * pad
    assert Cout % n_groups == 0

    # ---- time MLP hoisted out of the kernel: emb = Linear(Mish(t)) ----
    tf = t.astype(jnp.float32)
    emb = (tf * jnp.tanh(jnp.logaddexp(tf, 0.0))) @ lw.T.astype(jnp.float32)
    emb = (emb + lb.astype(jnp.float32)).reshape(B, 1, Cout)

    # ---- x: NCT -> time-padded NTC; only this (dominant) transfer is cast to
    #      compute_dtype (default bf16).  No K-fold im2col inflation any more.
    xp_t = jnp.transpose(jnp.pad(x.astype(jnp.float32),
                                 ((0, 0), (0, 0), (pad, pad))),
                         (0, 2, 1)).astype(compute_dtype)        # (B, Tp, Cin)

    # ---- per-tap conv1 weights augmented with the residual 1x1 conv ----
    w1t = jnp.transpose(w1, (2, 1, 0)).astype(jnp.float32)        # (K, Cin, Cout)
    res_t = jnp.zeros((K, Cin, Cout), jnp.float32).at[pad].set(
        rw.T.astype(jnp.float32))
    w1aug = jnp.concatenate([w1t, res_t], axis=-1)                # (K, Cin, 2*Cout)
    w2t = jnp.transpose(w2, (2, 1, 0)).astype(jnp.float32)        # (K, Cout, Cout)

    # ---- small per-channel vectors packed into a single (8, Cout) tile ----
    vec = jnp.stack([b1, g1w, g1b, b2, g2w, g2b, rb,
                     jnp.zeros_like(rb)], axis=0).astype(jnp.float32)

    # ---- group-membership matrix (group-mean scale 1/(T*cpg) folded in) ----
    cpg = Cout // n_groups
    gid = jnp.arange(Cout) // cpg
    gmat = (gid[:, None] == gid[None, :]).astype(jnp.float32) / float(T * cpg)

    # ---- block sizing & VMEM budget (generation-aware, best effort) ----
    vmem_cap, cores = _tpu_info()
    in_item = jnp.dtype(compute_dtype).itemsize
    per_b_bytes = (2 * (Tp * Cin * in_item          # x block (double-buffered)
                        + Cout * 4                  # time-emb block
                        + T * Cout * 4)             # output block
                   + Tp * Cout * 4)                 # hpad scratch (single)
    const_bytes = 2 * sum(int(a.size) * a.dtype.itemsize
                          for a in (w1aug, w2t, vec, gmat))
    budget = int(0.5 * vmem_cap)                    # headroom for Mosaic scratch
    min_steps = 2 * cores if cores > 1 else 1       # only cap on multi-TC chips

    Bb = batch_block if batch_block is not None else _pick_batch_block(
        B, T, per_b_bytes, const_bytes, budget, min_steps)
    assert B % Bb == 0, (B, Bb)

    need = Bb * per_b_bytes + const_bytes
    vmem_limit = int(min(int(0.8 * vmem_cap), max(16 * 1024 * 1024, 2 * need)))

    kernel = functools.partial(_residual_block_kernel, K, approx_mish)

    def full(a):
        nd = a.ndim
        return pl.BlockSpec(a.shape, lambda i, _nd=nd: (0,) * _nd)

    out_tc = pl.pallas_call(
        kernel,
        out_shape=jax.ShapeDtypeStruct((B, T, Cout), jnp.float32),
        grid=(B // Bb,),
        in_specs=[
            pl.BlockSpec((Bb, Tp, Cin), lambda i: (i, 0, 0)),   # padded x (NTC)
            pl.BlockSpec((Bb, 1, Cout), lambda i: (i, 0, 0)),   # time emb
            full(w1aug), full(w2t), full(vec), full(gmat),
        ],
        out_specs=pl.BlockSpec((Bb, T, Cout), lambda i: (i, 0, 0)),
        scratch_shapes=[pltpu.VMEM((Bb, Tp, Cout), jnp.float32)],
        compiler_params=pltpu.CompilerParams(
            dimension_semantics=("parallel",),
            vmem_limit_bytes=vmem_limit),
    )(xp_t, emb, w1aug, w2t, vec, gmat)

    return jnp.transpose(out_tc, (0, 2, 1))                       # (B, Cout, T)


def _ref_forward(x, t, params, n_groups=8):
    """Pure-JAX reference mirroring the PyTorch ResidualBlock forward."""
    (w1, b1, g1w, g1b, w2, b2, g2w, g2b, lw, lb, rw, rb) = params

    def mish(v):
        return v * jnp.tanh(jnp.log(1.0 + jnp.exp(v)))

    def conv1d(xx, w, b):
        K = w.shape[-1]
        pad = K // 2
        T = xx.shape[-1]
        xp = jnp.pad(xx, ((0, 0), (0, 0), (pad, pad)))
        out = b[None, :, None]
        for k in range(K):
            out = out + jnp.einsum('oi,bit->bot', w[:, :, k], xp[:, :, k:k + T])
        return out

    def gn(h, gamma, beta):
        B, C, T = h.shape
        hg = h.reshape(B, n_groups, -1)
        mu = hg.mean(-1, keepdims=True)
        var = ((hg - mu) ** 2).mean(-1, keepdims=True)
        hn = ((hg - mu) / jnp.sqrt(var + 1e-5)).reshape(B, C, T)
        return hn * gamma[None, :, None] + beta[None, :, None]

    h = mish(gn(conv1d(x, w1, b1), g1w, g1b))
    h = h + (mish(t) @ lw.T + lb)[:, :, None]
    h = mish(gn(conv1d(h, w2, b2), g2w, g2b))
    res = jnp.einsum('oi,bit->bot', rw, x) + rb[None, :, None]
    return h + res


if __name__ == "__main__":
    Cin, Cout, T, E, K = 4, 8, 16, 32, 5     # Cout divisible by n_groups=8

    key = jax.random.PRNGKey(0)
    kp, kx1, kt1, kx2, kt2 = jax.random.split(key, 5)

    ks = jax.random.split(kp, 12)
    w1 = 0.2 * jax.random.normal(ks[0], (Cout, Cin, K), jnp.float32)
    b1 = 0.1 * jax.random.normal(ks[1], (Cout,), jnp.float32)
    g1w = 1.0 + 0.1 * jax.random.normal(ks[2], (Cout,), jnp.float32)
    g1b = 0.1 * jax.random.normal(ks[3], (Cout,), jnp.float32)
    w2 = 0.2 * jax.random.normal(ks[4], (Cout, Cout, K), jnp.float32)
    b2 = 0.1 * jax.random.normal(ks[5], (Cout,), jnp.float32)
    g2w = 1.0 + 0.1 * jax.random.normal(ks[6], (Cout,), jnp.float32)
    g2b = 0.1 * jax.random.normal(ks[7], (Cout,), jnp.float32)
    lw = 0.2 * jax.random.normal(ks[8], (Cout, E), jnp.float32)
    lb = 0.1 * jax.random.normal(ks[9], (Cout,), jnp.float32)
    rw = 0.2 * jax.random.normal(ks[10], (Cout, Cin), jnp.float32)
    rb = 0.1 * jax.random.normal(ks[11], (Cout,), jnp.float32)
    params = (w1, b1, g1w, g1b, w2, b2, g2w, g2b, lw, lb, rw, rb)

    for B, kx, kt in ((2, kx1, kt1), (8, kx2, kt2)):
        x = jax.random.normal(kx, (B, Cin, T), jnp.float32)
        t = jax.random.normal(kt, (B, E), jnp.float32)
        ref = _ref_forward(x, t, params)

        # default path: bf16 HBM transfer for x + approx EUP reciprocal in Mish
        out = jax.block_until_ready(residual_block_forward(x, t, params))
        assert out.shape == (B, Cout, T), out.shape
        if not jnp.allclose(out, ref, atol=4e-2, rtol=4e-2):
            raise AssertionError(
                "default-path mismatch B=%d: max|err|=%.3e"
                % (B, float(jnp.max(jnp.abs(out - ref)))))

        # exact path: f32 transfer + exact reciprocal -- tight check
        out_x = jax.block_until_ready(residual_block_forward(
            x, t, params, compute_dtype=jnp.float32, approx_mish=False))
        if not jnp.allclose(out_x, ref, atol=1e-3, rtol=1e-3):
            raise AssertionError(
                "exact-path mismatch B=%d: max|err|=%.3e"
                % (B, float(jnp.max(jnp.abs(out_x - ref)))))

        # exercise a multi-step grid explicitly (4 steps when B=8)
        if B >= 4:
            out_m = jax.block_until_ready(residual_block_forward(
                x, t, params, batch_block=2, compute_dtype=jnp.float32,
                approx_mish=False))
            if not jnp.allclose(out_m, ref, atol=1e-3, rtol=1e-3):
                raise AssertionError(
                    "multi-step mismatch B=%d: max|err|=%.3e"
                    % (B, float(jnp.max(jnp.abs(out_m - ref)))))

    print("KERNEL_OK")
</pallas_src>

<mosaic_0001>
module attributes {stable_mosaic.version = 11 : i64} {
  func.func @_residual_block_kernel(%arg0: i32, %arg1: memref<2x20x4xbf16, #tpu.memory_space<vmem>>, %arg2: memref<2x1x8xf32, #tpu.memory_space<vmem>>, %arg3: memref<5x4x16xf32, #tpu.memory_space<vmem>>, %arg4: memref<5x8x8xf32, #tpu.memory_space<vmem>>, %arg5: memref<8x8xf32, #tpu.memory_space<vmem>>, %arg6: memref<8x8xf32, #tpu.memory_space<vmem>>, %arg7: memref<2x16x8xf32, #tpu.memory_space<vmem>>, %arg8: memref<2x20x8xf32, #tpu.memory_space<vmem>>) attributes {dimension_semantics = [#tpu.dimension_semantics<parallel>], iteration_bounds = array<i64: 1>, scalar_prefetch = 0 : i64, scratch_operands = 1 : i64, tpu.core_type = #tpu.core_type<tc>, window_params = [{transform_indices = @transform_0, window_bounds = array<i64: 2, 20, 4>}, {transform_indices = @transform_1, window_bounds = array<i64: 2, 1, 8>}, {pipeline_mode = #tpu.pipeline_mode<synchronous>, transform_indices = @transform_2, window_bounds = array<i64: 5, 4, 16>}, {pipeline_mode = #tpu.pipeline_mode<synchronous>, transform_indices = @transform_3, window_bounds = array<i64: 5, 8, 8>}, {pipeline_mode = #tpu.pipeline_mode<synchronous>, transform_indices = @transform_4, window_bounds = array<i64: 8, 8>}, {pipeline_mode = #tpu.pipeline_mode<synchronous>, transform_indices = @transform_5, window_bounds = array<i64: 8, 8>}, {transform_indices = @transform_6, window_bounds = array<i64: 2, 16, 8>}]} {
    %c0 = arith.constant 0 : index
    %c0_0 = arith.constant 0 : index
    %0 = vector.load %arg6[%c0, %c0_0] : memref<8x8xf32, #tpu.memory_space<vmem>>, vector<8x8xf32>
    %c0_1 = arith.constant 0 : index
    %c0_2 = arith.constant 0 : index
    %1 = vector.load %arg5[%c0_1, %c0_2] : memref<8x8xf32, #tpu.memory_space<vmem>>, vector<1x8xf32>
    %c1 = arith.constant 1 : index
    %c0_3 = arith.constant 0 : index
    %2 = vector.load %arg5[%c1, %c0_3] : memref<8x8xf32, #tpu.memory_space<vmem>>, vector<1x8xf32>
    %c2 = arith.constant 2 : index
    %c0_4 = arith.constant 0 : index
    %3 = vector.load %arg5[%c2, %c0_4] : memref<8x8xf32, #tpu.memory_space<vmem>>, vector<1x8xf32>
    %c3 = arith.constant 3 : index
    %c0_5 = arith.constant 0 : index
    %4 = vector.load %arg5[%c3, %c0_5] : memref<8x8xf32, #tpu.memory_space<vmem>>, vector<1x8xf32>
    %c4 = arith.constant 4 : index
    %c0_6 = arith.constant 0 : index
    %5 = vector.load %arg5[%c4, %c0_6] : memref<8x8xf32, #tpu.memory_space<vmem>>, vector<1x8xf32>
    %c5 = arith.constant 5 : index
    %c0_7 = arith.constant 0 : index
    %6 = vector.load %arg5[%c5, %c0_7] : memref<8x8xf32, #tpu.memory_space<vmem>>, vector<1x8xf32>
    %c6 = arith.constant 6 : index
    %c0_8 = arith.constant 0 : index
    %7 = vector.load %arg5[%c6, %c0_8] : memref<8x8xf32, #tpu.memory_space<vmem>>, vector<1x8xf32>
    %c0_9 = arith.constant 0 : index
    %c0_10 = arith.constant 0 : index
    %c0_11 = arith.constant 0 : index
    %8 = vector.load %arg1[%c0_9, %c0_10, %c0_11] : memref<2x20x4xbf16, #tpu.memory_space<vmem>>, vector<2x20x4xbf16>
    %9 = arith.extf %8 : vector<2x20x4xbf16> to vector<2x20x4xf32>
    %10 = vector.extract_strided_slice %9 {offsets = [0, 0, 0], sizes = [2, 16, 4], strides = [1, 1, 1]} : vector<2x20x4xf32> to vector<2x16x4xf32>
    %11 = vector.shape_cast %10 : vector<2x16x4xf32> to vector<32x4xf32>
    %c0_12 = arith.constant 0 : index
    %c0_13 = arith.constant 0 : index
    %c0_14 = arith.constant 0 : index
    %12 = vector.load %arg3[%c0_12, %c0_13, %c0_14] : memref<5x4x16xf32, #tpu.memory_space<vmem>>, vector<1x4x16xf32>
    %13 = vector.shape_cast %12 : vector<1x4x16xf32> to vector<4x16xf32>
    %cst = arith.constant dense<0.000000e+00> : vector<32x16xf32>
    %14 = tpu.matmul %11, %13, %cst {dimension_numbers = #tpu.dot_dimension_numbers<[1], [0], [0], [1], [0, 0, 1, 1], [], []>} : vector<32x4xf32>, vector<4x16xf32>, vector<32x16xf32> -> vector<32x16xf32>
    %15 = vector.extract_strided_slice %9 {offsets = [0, 1, 0], sizes = [2, 16, 4], strides = [1, 1, 1]} : vector<2x20x4xf32> to vector<2x16x4xf32>
    %16 = vector.shape_cast %15 : vector<2x16x4xf32> to vector<32x4xf32>
    %c1_15 = arith.constant 1 : index
    %c0_16 = arith.constant 0 : index
    %c0_17 = arith.constant 0 : index
    %17 = vector.load %arg3[%c1_15, %c0_16, %c0_17] : memref<5x4x16xf32, #tpu.memory_space<vmem>>, vector<1x4x16xf32>
    %18 = vector.shape_cast %17 : vector<1x4x16xf32> to vector<4x16xf32>
    %cst_18 = arith.constant dense<0.000000e+00> : vector<32x16xf32>
    %19 = tpu.matmul %16, %18, %cst_18 {dimension_numbers = #tpu.dot_dimension_numbers<[1], [0], [0], [1], [0, 0, 1, 1], [], []>} : vector<32x4xf32>, vector<4x16xf32>, vector<32x16xf32> -> vector<32x16xf32>
    %20 = arith.addf %14, %19 : vector<32x16xf32>
    %21 = vector.extract_strided_slice %9 {offsets = [0, 2, 0], sizes = [2, 16, 4], strides = [1, 1, 1]} : vector<2x20x4xf32> to vector<2x16x4xf32>
    %22 = vector.shape_cast %21 : vector<2x16x4xf32> to vector<32x4xf32>
    %c2_19 = arith.constant 2 : index
    %c0_20 = arith.constant 0 : index
    %c0_21 = arith.constant 0 : index
    %23 = vector.load %arg3[%c2_19, %c0_20, %c0_21] : memref<5x4x16xf32, #tpu.memory_space<vmem>>, vector<1x4x16xf32>
    %24 = vector.shape_cast %23 : vector<1x4x16xf32> to vector<4x16xf32>
    %cst_22 = arith.constant dense<0.000000e+00> : vector<32x16xf32>
    %25 = tpu.matmul %22, %24, %cst_22 {dimension_numbers = #tpu.dot_dimension_numbers<[1], [0], [0], [1], [0, 0, 1, 1], [], []>} : vector<32x4xf32>, vector<4x16xf32>, vector<32x16xf32> -> vector<32x16xf32>
    %26 = arith.addf %20, %25 : vector<32x16xf32>
    %27 = vector.extract_strided_slice %9 {offsets = [0, 3, 0], sizes = [2, 16, 4], strides = [1, 1, 1]} : vector<2x20x4xf32> to vector<2x16x4xf32>
    %28 = vector.shape_cast %27 : vector<2x16x4xf32> to vector<32x4xf32>
    %c3_23 = arith.constant 3 : index
    %c0_24 = arith.constant 0 : index
    %c0_25 = arith.constant 0 : index
    %29 = vector.load %arg3[%c3_23, %c0_24, %c0_25] : memref<5x4x16xf32, #tpu.memory_space<vmem>>, vector<1x4x16xf32>
    %30 = vector.shape_cast %29 : vector<1x4x16xf32> to vector<4x16xf32>
    %cst_26 = arith.constant dense<0.000000e+00> : vector<32x16xf32>
    %31 = tpu.matmul %28, %30, %cst_26 {dimension_numbers = #tpu.dot_dimension_numbers<[1], [0], [0], [1], [0, 0, 1, 1], [], []>} : vector<32x4xf32>, vector<4x16xf32>, vector<32x16xf32> -> vector<32x16xf32>
    %32 = arith.addf %26, %31 : vector<32x16xf32>
    %33 = vector.extract_strided_slice %9 {offsets = [0, 4, 0], sizes = [2, 16, 4], strides = [1, 1, 1]} : vector<2x20x4xf32> to vector<2x16x4xf32>
    %34 = vector.shape_cast %33 : vector<2x16x4xf32> to vector<32x4xf32>
    %c4_27 = arith.constant 4 : index
    %c0_28 = arith.constant 0 : index
    %c0_29 = arith.constant 0 : index
    %35 = vector.load %arg3[%c4_27, %c0_28, %c0_29] : memref<5x4x16xf32, #tpu.memory_space<vmem>>, vector<1x4x16xf32>
    %36 = vector.shape_cast %35 : vector<1x4x16xf32> to vector<4x16xf32>
    %cst_30 = arith.constant dense<0.000000e+00> : vector<32x16xf32>
    %37 = tpu.matmul %34, %36, %cst_30 {dimension_numbers = #tpu.dot_dimension_numbers<[1], [0], [0], [1], [0, 0, 1, 1], [], []>} : vector<32x4xf32>, vector<4x16xf32>, vector<32x16xf32> -> vector<32x16xf32>
    %38 = arith.addf %32, %37 : vector<32x16xf32>
    %39 = vector.extract_strided_slice %38 {offsets = [0, 0], sizes = [32, 8], strides = [1, 1]} : vector<32x16xf32> to vector<32x8xf32>
    %40 = vector.broadcast %1 : vector<1x8xf32> to vector<32x8xf32>
    %41 = arith.addf %39, %40 : vector<32x8xf32>
    %42 = vector.extract_strided_slice %38 {offsets = [0, 8], sizes = [32, 8], strides = [1, 1]} : vector<32x16xf32> to vector<32x8xf32>
    %43 = vector.broadcast %7 : vector<1x8xf32> to vector<32x8xf32>
    %44 = arith.addf %42, %43 : vector<32x8xf32>
    %45 = vector.shape_cast %41 : vector<32x8xf32> to vector<2x16x8xf32>
    %cst_31 = arith.constant dense<0.000000e+00> : vector<2x8xf32>
    %46 = vector.multi_reduction <add>, %45, %cst_31 [1] : vector<2x16x8xf32> to vector<2x8xf32>
    %47 = arith.mulf %45, %45 : vector<2x16x8xf32>
    %cst_32 = arith.constant dense<0.000000e+00> : vector<2x8xf32>
    %48 = vector.multi_reduction <add>, %47, %cst_32 [1] : vector<2x16x8xf32> to vector<2x8xf32>
    %cst_33 = arith.constant dense<0.000000e+00> : vector<2x8xf32>
    %49 = tpu.matmul %46, %0, %cst_33 {dimension_numbers = #tpu.dot_dimension_numbers<[1], [0], [0], [1], [0, 0, 1, 1], [], []>} : vector<2x8xf32>, vector<8x8xf32>, vector<2x8xf32> -> vector<2x8xf32>
    %cst_34 = arith.constant dense<0.000000e+00> : vector<2x8xf32>
    %50 = tpu.matmul %48, %0, %cst_34 {dimension_numbers = #tpu.dot_dimension_numbers<[1], [0], [0], [1], [0, 0, 1, 1], [], []>} : vector<2x8xf32>, vector<8x8xf32>, vector<2x8xf32> -> vector<2x8xf32>
    %51 = arith.mulf %49, %49 : vector<2x8xf32>
    %52 = arith.subf %50, %51 : vector<2x8xf32>
    %cst_35 = arith.constant 0.000000e+00 : f32
    %53 = vector.broadcast %cst_35 : f32 to vector<2x8xf32>
    %54 = arith.maximumf %52, %53 : vector<2x8xf32>
    %cst_36 = arith.constant 9.99999974E-6 : f32
    %55 = vector.broadcast %cst_36 : f32 to vector<2x8xf32>
    %56 = arith.addf %54, %55 : vector<2x8xf32>
    %57 = math.rsqrt %56 : vector<2x8xf32>
    %58 = vector.shape_cast %49 : vector<2x8xf32> to vector<2x1x8xf32>
    %59 = vector.broadcast %58 : vector<2x1x8xf32> to vector<2x16x8xf32>
    %60 = arith.subf %45, %59 : vector<2x16x8xf32>
    %61 = vector.shape_cast %57 : vector<2x8xf32> to vector<2x1x8xf32>
    %62 = vector.broadcast %61 : vector<2x1x8xf32> to vector<2x16x8xf32>
    %63 = arith.mulf %60, %62 : vector<2x16x8xf32>
    %64 = vector.shape_cast %2 : vector<1x8xf32> to vector<1x1x8xf32>
    %65 = vector.broadcast %64 : vector<1x1x8xf32> to vector<2x16x8xf32>
    %66 = arith.mulf %63, %65 : vector<2x16x8xf32>
    %67 = vector.shape_cast %3 : vector<1x8xf32> to vector<1x1x8xf32>
    %68 = vector.broadcast %67 : vector<1x1x8xf32> to vector<2x16x8xf32>
    %69 = arith.addf %66, %68 : vector<2x16x8xf32>
    %cst_37 = arith.constant 2.000000e+01 : f32
    %70 = vector.broadcast %cst_37 : f32 to vector<2x16x8xf32>
    %71 = arith.minimumf %69, %70 : vector<2x16x8xf32>
    %72 = math.exp %71 : vector<2x16x8xf32>
    %cst_38 = arith.constant 2.000000e+00 : f32
    %73 = vector.broadcast %cst_38 : f32 to vector<2x16x8xf32>
    %74 = arith.addf %72, %73 : vector<2x16x8xf32>
    %75 = arith.mulf %72, %74 : vector<2x16x8xf32>
    %76 = arith.mulf %69, %75 : vector<2x16x8xf32>
    %cst_39 = arith.constant 2.000000e+00 : f32
    %77 = vector.broadcast %cst_39 : f32 to vector<2x16x8xf32>
    %78 = arith.addf %75, %77 : vector<2x16x8xf32>
    %79 = tpu.reciprocal %78 {approx = true} : vector<2x16x8xf32> -> vector<2x16x8xf32>
    %80 = arith.mulf %76, %79 : vector<2x16x8xf32>
    %c0_40 = arith.constant 0 : index
    %c0_41 = arith.constant 0 : index
    %c0_42 = arith.constant 0 : index
    %81 = vector.load %arg2[%c0_40, %c0_41, %c0_42] : memref<2x1x8xf32, #tpu.memory_space<vmem>>, vector<2x1x8xf32>
    %82 = vector.broadcast %81 : vector<2x1x8xf32> to vector<2x16x8xf32>
    %83 = arith.addf %80, %82 : vector<2x16x8xf32>
    %c0_43 = arith.constant 0 : index
    %c2_44 = arith.constant 2 : index
    %c0_45 = arith.constant 0 : index
    %84 = vector.load %arg8[%c0_43, %c2_44, %c0_45] : memref<2x20x8xf32, #tpu.memory_space<vmem>>, vector<2x16x8xf32>
    tpu.vector_store %arg8[%c0_43, %c2_44, %c0_45], %83 {strides = array<i32>} : memref<2x20x8xf32, #tpu.memory_space<vmem>>, vector<2x16x8xf32>,
    %cst_46 = arith.constant 0.000000e+00 : f32
    %85 = vector.broadcast %cst_46 : f32 to vector<2x2x8xf32>
    %c0_47 = arith.constant 0 : index
    %c0_48 = arith.constant 0 : index
    %c0_49 = arith.constant 0 : index
    %86 = vector.load %arg8[%c0_47, %c0_48, %c0_49] : memref<2x20x8xf32, #tpu.memory_space<vmem>>, vector<2x2x8xf32>
    tpu.vector_store %arg8[%c0_47, %c0_48, %c0_49], %85 {strides = array<i32>} : memref<2x20x8xf32, #tpu.memory_space<vmem>>, vector<2x2x8xf32>,
    %c0_50 = arith.constant 0 : index
    %c18 = arith.constant 18 : index
    %c0_51 = arith.constant 0 : index
    %87 = vector.load %arg8[%c0_50, %c18, %c0_51] : memref<2x20x8xf32, #tpu.memory_space<vmem>>, vector<2x2x8xf32>
    tpu.vector_store %arg8[%c0_50, %c18, %c0_51], %85 {strides = array<i32>} : memref<2x20x8xf32, #tpu.memory_space<vmem>>, vector<2x2x8xf32>,
    %c0_52 = arith.constant 0 : index
    %c0_53 = arith.constant 0 : index
    %c0_54 = arith.constant 0 : index
    %88 = vector.load %arg8[%c0_52, %c0_53, %c0_54] : memref<2x20x8xf32, #tpu.memory_space<vmem>>, vector<2x20x8xf32>
    %89 = vector.extract_strided_slice %88 {offsets = [0, 0, 0], sizes = [2, 16, 8], strides = [1, 1, 1]} : vector<2x20x8xf32> to vector<2x16x8xf32>
    %90 = vector.shape_cast %89 : vector<2x16x8xf32> to vector<32x8xf32>
    %c0_55 = arith.constant 0 : index
    %c0_56 = arith.constant 0 : index
    %c0_57 = arith.constant 0 : index
    %91 = vector.load %arg4[%c0_55, %c0_56, %c0_57] : memref<5x8x8xf32, #tpu.memory_space<vmem>>, vector<1x8x8xf32>
    %92 = vector.shape_cast %91 : vector<1x8x8xf32> to vector<8x8xf32>
    %cst_58 = arith.constant dense<0.000000e+00> : vector<32x8xf32>
    %93 = tpu.matmul %90, %92, %cst_58 {dimension_numbers = #tpu.dot_dimension_numbers<[1], [0], [0], [1], [0, 0, 1, 1], [], []>} : vector<32x8xf32>, vector<8x8xf32>, vector<32x8xf32> -> vector<32x8xf32>
    %94 = vector.extract_strided_slice %88 {offsets = [0, 1, 0], sizes = [2, 16, 8], strides = [1, 1, 1]} : vector<2x20x8xf32> to vector<2x16x8xf32>
    %95 = vector.shape_cast %94 : vector<2x16x8xf32> to vector<32x8xf32>
    %c1_59 = arith.constant 1 : index
    %c0_60 = arith.constant 0 : index
    %c0_61 = arith.constant 0 : index
    %96 = vector.load %arg4[%c1_59, %c0_60, %c0_61] : memref<5x8x8xf32, #tpu.memory_space<vmem>>, vector<1x8x8xf32>
    %97 = vector.shape_cast %96 : vector<1x8x8xf32> to vector<8x8xf32>
    %cst_62 = arith.constant dense<0.000000e+00> : vector<32x8xf32>
    %98 = tpu.matmul %95, %97, %cst_62 {dimension_numbers = #tpu.dot_dimension_numbers<[1], [0], [0], [1], [0, 0, 1, 1], [], []>} : vector<32x8xf32>, vector<8x8xf32>, vector<32x8xf32> -> vector<32x8xf32>
    %99 = arith.addf %93, %98 : vector<32x8xf32>
    %100 = vector.extract_strided_slice %88 {offsets = [0, 2, 0], sizes = [2, 16, 8], strides = [1, 1, 1]} : vector<2x20x8xf32> to vector<2x16x8xf32>
    %101 = vector.shape_cast %100 : vector<2x16x8xf32> to vector<32x8xf32>
    %c2_63 = arith.constant 2 : index
    %c0_64 = arith.constant 0 : index
    %c0_65 = arith.constant 0 : index
    %102 = vector.load %arg4[%c2_63, %c0_64, %c0_65] : memref<5x8x8xf32, #tpu.memory_space<vmem>>, vector<1x8x8xf32>
    %103 = vector.shape_cast %102 : vector<1x8x8xf32> to vector<8x8xf32>
    %cst_66 = arith.constant dense<0.000000e+00> : vector<32x8xf32>
    %104 = tpu.matmul %101, %103, %cst_66 {dimension_numbers = #tpu.dot_dimension_numbers<[1], [0], [0], [1], [0, 0, 1, 1], [], []>} : vector<32x8xf32>, vector<8x8xf32>, vector<32x8xf32> -> vector<32x8xf32>
    %105 = arith.addf %99, %104 : vector<32x8xf32>
    %106 = vector.extract_strided_slice %88 {offsets = [0, 3, 0], sizes = [2, 16, 8], strides = [1, 1, 1]} : vector<2x20x8xf32> to vector<2x16x8xf32>
    %107 = vector.shape_cast %106 : vector<2x16x8xf32> to vector<32x8xf32>
    %c3_67 = arith.constant 3 : index
    %c0_68 = arith.constant 0 : index
    %c0_69 = arith.constant 0 : index
    %108 = vector.load %arg4[%c3_67, %c0_68, %c0_69] : memref<5x8x8xf32, #tpu.memory_space<vmem>>, vector<1x8x8xf32>
    %109 = vector.shape_cast %108 : vector<1x8x8xf32> to vector<8x8xf32>
    %cst_70 = arith.constant dense<0.000000e+00> : vector<32x8xf32>
    %110 = tpu.matmul %107, %109, %cst_70 {dimension_numbers = #tpu.dot_dimension_numbers<[1], [0], [0], [1], [0, 0, 1, 1], [], []>} : vector<32x8xf32>, vector<8x8xf32>, vector<32x8xf32> -> vector<32x8xf32>
    %111 = arith.addf %105, %110 : vector<32x8xf32>
    %112 = vector.extract_strided_slice %88 {offsets = [0, 4, 0], sizes = [2, 16, 8], strides = [1, 1, 1]} : vector<2x20x8xf32> to vector<2x16x8xf32>
    %113 = vector.shape_cast %112 : vector<2x16x8xf32> to vector<32x8xf32>
    %c4_71 = arith.constant 4 : index
    %c0_72 = arith.constant 0 : index
    %c0_73 = arith.constant 0 : index
    %114 = vector.load %arg4[%c4_71, %c0_72, %c0_73] : memref<5x8x8xf32, #tpu.memory_space<vmem>>, vector<1x8x8xf32>
    %115 = vector.shape_cast %114 : vector<1x8x8xf32> to vector<8x8xf32>
    %cst_74 = arith.constant dense<0.000000e+00> : vector<32x8xf32>
    %116 = tpu.matmul %113, %115, %cst_74 {dimension_numbers = #tpu.dot_dimension_numbers<[1], [0], [0], [1], [0, 0, 1, 1], [], []>} : vector<32x8xf32>, vector<8x8xf32>, vector<32x8xf32> -> vector<32x8xf32>
    %117 = arith.addf %111, %116 : vector<32x8xf32>
    %118 = vector.broadcast %4 : vector<1x8xf32> to vector<32x8xf32>
    %119 = arith.addf %117, %118 : vector<32x8xf32>
    %120 = vector.shape_cast %119 : vector<32x8xf32> to vector<2x16x8xf32>
    %cst_75 = arith.constant dense<0.000000e+00> : vector<2x8xf32>
    %121 = vector.multi_reduction <add>, %120, %cst_75 [1] : vector<2x16x8xf32> to vector<2x8xf32>
    %122 = arith.mulf %120, %120 : vector<2x16x8xf32>
    %cst_76 = arith.constant dense<0.000000e+00> : vector<2x8xf32>
    %123 = vector.multi_reduction <add>, %122, %cst_76 [1] : vector<2x16x8xf32> to vector<2x8xf32>
    %cst_77 = arith.constant dense<0.000000e+00> : vector<2x8xf32>
    %124 = tpu.matmul %121, %0, %cst_77 {dimension_numbers = #tpu.dot_dimension_numbers<[1], [0], [0], [1], [0, 0, 1, 1], [], []>} : vector<2x8xf32>, vector<8x8xf32>, vector<2x8xf32> -> vector<2x8xf32>
    %cst_78 = arith.constant dense<0.000000e+00> : vector<2x8xf32>
    %125 = tpu.matmul %123, %0, %cst_78 {dimension_numbers = #tpu.dot_dimension_numbers<[1], [0], [0], [1], [0, 0, 1, 1], [], []>} : vector<2x8xf32>, vector<8x8xf32>, vector<2x8xf32> -> vector<2x8xf32>
    %126 = arith.mulf %124, %124 : vector<2x8xf32>
    %127 = arith.subf %125, %126 : vector<2x8xf32>
    %cst_79 = arith.constant 0.000000e+00 : f32
    %128 = vector.broadcast %cst_79 : f32 to vector<2x8xf32>
    %129 = arith.maximumf %127, %128 : vector<2x8xf32>
    %cst_80 = arith.constant 9.99999974E-6 : f32
    %130 = vector.broadcast %cst_80 : f32 to vector<2x8xf32>
    %131 = arith.addf %129, %130 : vector<2x8xf32>
    %132 = math.rsqrt %131 : vector<2x8xf32>
    %133 = vector.shape_cast %124 : vector<2x8xf32> to vector<2x1x8xf32>
    %134 = vector.broadcast %133 : vector<2x1x8xf32> to vector<2x16x8xf32>
    %135 = arith.subf %120, %134 : vector<2x16x8xf32>
    %136 = vector.shape_cast %132 : vector<2x8xf32> to vector<2x1x8xf32>
    %137 = vector.broadcast %136 : vector<2x1x8xf32> to vector<2x16x8xf32>
    %138 = arith.mulf %135, %137 : vector<2x16x8xf32>
    %139 = vector.shape_cast %5 : vector<1x8xf32> to vector<1x1x8xf32>
    %140 = vector.broadcast %139 : vector<1x1x8xf32> to vector<2x16x8xf32>
    %141 = arith.mulf %138, %140 : vector<2x16x8xf32>
    %142 = vector.shape_cast %6 : vector<1x8xf32> to vector<1x1x8xf32>
    %143 = vector.broadcast %142 : vector<1x1x8xf32> to vector<2x16x8xf32>
    %144 = arith.addf %141, %143 : vector<2x16x8xf32>
    %cst_81 = arith.constant 2.000000e+01 : f32
    %145 = vector.broadcast %cst_81 : f32 to vector<2x16x8xf32>
    %146 = arith.minimumf %144, %145 : vector<2x16x8xf32>
    %147 = math.exp %146 : vector<2x16x8xf32>
    %cst_82 = arith.constant 2.000000e+00 : f32
    %148 = vector.broadcast %cst_82 : f32 to vector<2x16x8xf32>
    %149 = arith.addf %147, %148 : vector<2x16x8xf32>
    %150 = arith.mulf %147, %149 : vector<2x16x8xf32>
    %151 = arith.mulf %144, %150 : vector<2x16x8xf32>
    %cst_83 = arith.constant 2.000000e+00 : f32
    %152 = vector.broadcast %cst_83 : f32 to vector<2x16x8xf32>
    %153 = arith.addf %150, %152 : vector<2x16x8xf32>
    %154 = tpu.reciprocal %153 {approx = true} : vector<2x16x8xf32> -> vector<2x16x8xf32>
    %155 = arith.mulf %151, %154 : vector<2x16x8xf32>
    %156 = vector.shape_cast %44 : vector<32x8xf32> to vector<2x16x8xf32>
    %157 = arith.addf %155, %156 : vector<2x16x8xf32>
    %c0_84 = arith.constant 0 : index
    %c0_85 = arith.constant 0 : index
    %c0_86 = arith.constant 0 : index
    %158 = vector.load %arg7[%c0_84, %c0_85, %c0_86] : memref<2x16x8xf32, #tpu.memory_space<vmem>>, vector<2x16x8xf32>
    tpu.vector_store %arg7[%c0_84, %c0_85, %c0_86], %157 {strides = array<i32>} : memref<2x16x8xf32, #tpu.memory_space<vmem>>, vector<2x16x8xf32>,
    return
  }
  func.func @transform_0(%arg0: i32) -> (i32, i32, i32) {
    %c0_i32 = arith.constant 0 : i32
    %c0_i32_0 = arith.constant 0 : i32
    %c0_i32_1 = arith.constant 0 : i32
    return %arg0, %c0_i32, %c0_i32_0 : i32, i32, i32
  }
  func.func @transform_1(%arg0: i32) -> (i32, i32, i32) {
    %c0_i32 = arith.constant 0 : i32
    %c0_i32_0 = arith.constant 0 : i32
    %c0_i32_1 = arith.constant 0 : i32
    return %arg0, %c0_i32, %c0_i32_0 : i32, i32, i32
  }
  func.func @transform_2(%arg0: i32) -> (i32, i32, i32) {
    %c0_i32 = arith.constant 0 : i32
    %c0_i32_0 = arith.constant 0 : i32
    %c0_i32_1 = arith.constant 0 : i32
    %c0_i32_2 = arith.constant 0 : i32
    return %c0_i32, %c0_i32_0, %c0_i32_1 : i32, i32, i32
  }
  func.func @transform_3(%arg0: i32) -> (i32, i32, i32) {
    %c0_i32 = arith.constant 0 : i32
    %c0_i32_0 = arith.constant 0 : i32
    %c0_i32_1 = arith.constant 0 : i32
    %c0_i32_2 = arith.constant 0 : i32
    return %c0_i32, %c0_i32_0, %c0_i32_1 : i32, i32, i32
  }
  func.func @transform_4(%arg0: i32) -> (i32, i32) {
    %c0_i32 = arith.constant 0 : i32
    %c0_i32_0 = arith.constant 0 : i32
    %c0_i32_1 = arith.constant 0 : i32
    return %c0_i32, %c0_i32_0 : i32, i32
  }
  func.func @transform_5(%arg0: i32) -> (i32, i32) {
    %c0_i32 = arith.constant 0 : i32
    %c0_i32_0 = arith.constant 0 : i32
    %c0_i32_1 = arith.constant 0 : i32
    return %c0_i32, %c0_i32_0 : i32, i32
  }
  func.func @transform_6(%arg0: i32) -> (i32, i32, i32) {
    %c0_i32 = arith.constant 0 : i32
    %c0_i32_0 = arith.constant 0 : i32
    %c0_i32_1 = arith.constant 0 : i32
    return %arg0, %c0_i32, %c0_i32_0 : i32, i32, i32
  }
}

</mosaic_0001>

<llo_original>
// kernel: tpu_custom_call.1
$region0: #{tpu_custom_call.1}
  #allocation0 [shape = 'u32[]', space=smem, size = 0x4, offset = 0x4, fixed_abs, tag = 'smem constant byte address 0x4 - core index']
  #allocation1 [shape = 'u32[144,128]{1,0:T(1,128)}', space=vmem, size = 0x12000, scoped, tag = 'internal scratch']
  #allocation2 [shape = 'f32[2,20,8]{2,1,0:T(8,128)}', space=vmem, size = 0x6000, scoped, tag = 'scratch operand']
  %s0 = inlined_call_operand.vmem [shape: bf16[2,20,4], index: 0, kind: input, shape index: {}]
  %s1 = inlined_call_operand.vmem [shape: f32[2,1,8], index: 1, kind: input, shape index: {}]
  %s2 = inlined_call_operand.vmem [shape: f32[5,4,16], index: 2, kind: input, shape index: {}]
  %s3 = inlined_call_operand.hbm [shape: f32[5,8,8], index: 3, kind: input, shape index: {}]
  %s4 = inlined_call_operand.vmem [shape: f32[8,8], index: 4, kind: input, shape index: {}]
  %s5 = inlined_call_operand.vmem [shape: f32[8,8], index: 5, kind: input, shape index: {}]
  %s6 = inlined_call_operand.vmem [shape: f32[2,16,8], index: 6, kind: output, shape index: {}]
  %s7 = sld [smem:[#allocation0]]
  $region38: #{tpu_custom_call.1} parent=0
    _
  %s9 = ssub.s32 1, %s7
  %s10 = scalar_select 0, %s9, %s7
  $region1: #{tpu_custom_call.1} parent=0
    #allocation3 [shape = 'u8[20480]{0}', space=vmem, size = 0x5000, scoped, tag = 'input window, operand 3, single buffered']
    #allocation4 [shape = 's32[1]{0}', space=sflag, size = 0x4, scoped, tag = 'scoped memory for tpu_custom_call.1']
    %11 = vsyncpa [#allocation4], 0
    // Predicated region
    $region2: #{tpu_custom_call.1} parent=1 // pred_check
      _
    $region3: #{tpu_custom_call.1} parent=1 // pred_check_branch
      %13 = sbr.rel (0) target = $region5
    $region4: #{tpu_custom_call.1} parent=1 // pred_region
      _
    $region5: #{tpu_custom_call.1} parent=1 // pred_fallthru
      _
    // Predicated region
    $region6: #{tpu_custom_call.1} parent=1 // pred_check
      _
    $region7: #{tpu_custom_call.1} parent=1 // pred_check_branch
      %15 = sbr.rel (0) target = $region9
    $region8: #{tpu_custom_call.1} parent=1 // pred_region
      _
    $region9: #{tpu_custom_call.1} parent=1 // pred_fallthru
      _
    // Predicated region
    $region10: #{tpu_custom_call.1} parent=1 // pred_check
      _
    $region11: #{tpu_custom_call.1} parent=1 // pred_check_branch
      %17 = sbr.rel (0) target = $region13
    $region12: #{tpu_custom_call.1} parent=1 // pred_region
      _
    $region13: #{tpu_custom_call.1} parent=1 // pred_fallthru
      _
    // Predicated region
    $region14: #{tpu_custom_call.1} parent=1 // pred_check
      _
    $region15: #{tpu_custom_call.1} parent=1 // pred_check_branch
      %19 = sbr.rel (0) target = $region17
    $region16: #{tpu_custom_call.1} parent=1 // pred_region
      %s21 = ssub.s32 640, 640
      %22 = vsyncadd [#allocation4], %s21
      %s23 = sshll.u32 [#allocation3], 4
      %s24 = int_to_ptr.vmem [resolvable:$true] %s23
      %29 = dma.hbm_to_vmem [thread:$0]  %s3, 640, %s24, [#allocation4], 128, 128, 8
    $region17: #{tpu_custom_call.1} parent=1 // pred_fallthru
      _
    // Predicated region
    $region18: #{tpu_custom_call.1} parent=1 // pred_check
      _
    $region19: #{tpu_custom_call.1} parent=1 // pred_check_branch
      %31 = sbr.rel (0) target = $region21
    $region20: #{tpu_custom_call.1} parent=1 // pred_region
      _
    $region21: #{tpu_custom_call.1} parent=1 // pred_fallthru
      _
    // Predicated region
    $region22: #{tpu_custom_call.1} parent=1 // pred_check
      _
    $region23: #{tpu_custom_call.1} parent=1 // pred_check_branch
      %33 = sbr.rel (0) target = $region25
    $region24: #{tpu_custom_call.1} parent=1 // pred_region
      _
    $region25: #{tpu_custom_call.1} parent=1 // pred_fallthru
      _
    // Predicated region
    $region26: #{tpu_custom_call.1} parent=1 // pred_check
      _
    $region27: #{tpu_custom_call.1} parent=1 // pred_check_branch
      %35 = sbr.rel (0) target = $region29
    $region28: #{tpu_custom_call.1} parent=1 // pred_region
      %36 = dma.done [#allocation4], 640
    $region29: #{tpu_custom_call.1} parent=1 // pred_fallthru
      _
    %v37 = vld [vmem:[%s5] sm:$0xff]
    %v38 = vld [vmem:[%s4] sm:$0x1]
    %v39 = vld [vmem:[%s4 + $0x1] sm:$0x1]
    %v40 = vld [vmem:[%s4 + $0x2] sm:$0x1]
    %v41 = vld [vmem:[%s4 + $0x3] sm:$0x1]
    %v42 = vld [vmem:[%s4 + $0x4] sm:$0x1]
    %v43 = vld [vmem:[%s4 + $0x5] sm:$0x1]
    %v44 = vld [vmem:[%s4 + $0x6] sm:$0x1]
    %v45 = vld [vmem:[%s0] sm:$0xf]
    %v46 = vld [vmem:[%s0 + $0x4] sm:$0xf]
    %v47 = vld [vmem:[%s0 + $0x8] sm:$0x3]
    %v48 = vld [vmem:[%s0 + $0xc] sm:$0xf]
    %v49 = vld [vmem:[%s0 + $0x10] sm:$0xf]
    %v50 = vld [vmem:[%s0 + $0x14] sm:$0x3]
    %v51 = vunpack.c.l.bf16 %v45
    %v52 = vunpack.c.l.bf16 %v46
    %v53 = vunpack.c.l.bf16 %v47
    %v54 = vunpack.c.l.bf16 %v48
    %v55 = vunpack.c.l.bf16 %v49
    %v56 = vunpack.c.l.bf16 %v50
    %v57 = vld [vmem:[%s2] sm:$0xf]
    %vm64 = vcmask 1046528
    %v65 = vrot.slane %v51, 1
    %v66 = vrot.slane %v52, 1
    %v67 = vsel %vm64, %v65, %v66
    %v68 = vrot.slane %v53, 1
    %v69 = vsel %vm64, %v66, %v68
    %v70 = vrot.slane %v54, 1
    %v71 = vrot.slane %v55, 1
    %v72 = vsel %vm64, %v70, %v71
    %v73 = vrot.slane %v56, 1
    %v74 = vsel %vm64, %v71, %v73
    %s75 = scalar_lea.vmem %s2, 4
    %v76 = vld [vmem:[%s75] sm:$0xf]
    %vm77 = vcmask 31744
    %v78 = vsel %vm77, %v67, 0
    %v80 = vsel %vm77, %v69, 0
    %v82 = vsel %vm77, %v72, 0
    %v84 = vsel %vm77, %v74, 0
    %vm86 = vcmask 1043456
    %v88 = vsel %vm86, %v76, 0
    %90 = vmatprep.subr.mxu0 0.0
    %91 = vmatpush1.msra.mxu0 %v88
    %92 = vmatprep.subr.mxu0 0.0
    %93 = vmatpush1.msra.mxu0 0.0
    %94 = vmatprep.subr.mxu0 0.0
    %95 = vmatpush1.msra.mxu0 0.0
    %96 = vmatprep.subr.mxu0 0.0
    %97 = vmatpush1.msra.mxu0 0.0
    %98 = vmatprep.subr.mxu0 0.0
    %99 = vmatpush1.msra.mxu0 0.0
    %100 = vmatprep.subr.mxu0 0.0
    %101 = vmatpush1.msra.mxu0 0.0
    %102 = vmatprep.subr.mxu0 0.0
    %103 = vmatpush1.msra.mxu0 0.0
    %104 = vmatprep.subr.mxu0 0.0
    %105 = vmatpush1.msra.mxu0 0.0
    %106 = vmatprep.subr.mxu0 0.0
    %107 = vmatpush1.msra.mxu0 0.0
    %108 = vmatprep.subr.mxu0 0.0
    %109 = vmatpush1.msra.mxu0 0.0
    %110 = vmatprep.subr.mxu0 0.0
    %111 = vmatpush1.msra.mxu0 0.0
    %112 = vmatprep.subr.mxu0 0.0
    %113 = vmatpush1.msra.mxu0 0.0
    %114 = vmatprep.subr.mxu0 0.0
    %115 = vmatpush1.msra.mxu0 0.0
    %116 = vmatprep.subr.mxu0 0.0
    %117 = vmatpush1.msra.mxu0 0.0
    %118 = vmatprep.subr.mxu0 0.0
    %119 = vmatpush1.msra.mxu0 0.0
    %120 = vmatprep.subr.mxu0 0.0
    %121 = vmatpush1.msra.mxu0 0.0
    %122 = vmatprep.subr.mxu0 0.0
    %123 = vmatpush1.msra.mxu0 0.0
    %124 = vmatprep.subr.mxu0 0.0
    %125 = vmatpush1.msra.mxu0 0.0
    %126 = vmatprep.subr.mxu0 0.0
    %127 = vmatpush1.msra.mxu0 0.0
    %128 = vmatprep.subr.mxu0 0.0
    %129 = vmatpush1.msra.mxu0 0.0
    %130 = vmatprep.subr.mxu0 0.0
    %131 = vmatpush1.msra.mxu0 0.0
    %132 = vmatprep.subr.mxu0 0.0
    %133 = vmatpush1.msra.mxu0 0.0
    %134 = vmatprep.subr.mxu0 0.0
    %135 = vmatpush1.msra.mxu0 0.0
    %136 = vmatprep.subr.mxu0 0.0
    %137 = vmatpush1.msra.mxu0 0.0
    %138 = vmatprep.subr.mxu0 0.0
    %139 = vmatpush1.msra.mxu0 0.0
    %140 = vmatprep.subr.mxu0 0.0
    %141 = vmatpush1.msra.mxu0 0.0
    %142 = vmatprep.subr.mxu0 0.0
    %143 = vmatpush1.msra.mxu0 0.0
    %144 = vmatprep.subr.mxu0 0.0
    %145 = vmatpush1.msra.mxu0 0.0
    %146 = vmatprep.subr.mxu0 0.0
    %147 = vmatpush1.msra.mxu0 0.0
    %148 = vmatprep.subr.mxu0 0.0
    %149 = vmatpush1.msra.mxu0 0.0
    %150 = vmatprep.subr.mxu0 0.0
    %151 = vmatpush1.msra.mxu0 0.0
    %152 = vmatprep.subr.mxu0 0.0
    %153 = vmatpush1.msra.mxu0 0.0
    %154 = vmatprep.mubr.f32.mxu0 0.0
    %155 = vmatmul.mubr.f32.gmra.mrb[0].mxu0 %v78
    %v156 = vpop.f32.mrb[0].mxu0
    %v157 = vadd.f32 0.0, %v156
    %v158 = vpop.f32.mrb[0].mxu0
    %159 = vmatprep.mubr.f32.mxu0 0.0
    %160 = vmatmul.mubr.f32.gmra.mrb[0].mxu0 %v80
    %v161 = vpop.f32.mrb[0].mxu0
    %v162 = vadd.f32 0.0, %v161
    %v163 = vpop.f32.mrb[0].mxu0
    %164 = vmatprep.mubr.f32.mxu0 0.0
    %165 = vmatmul.mubr.f32.gmra.mrb[0].mxu0 %v82
    %v166 = vpop.f32.mrb[0].mxu0
    %v167 = vadd.f32 0.0, %v166
    %v168 = vpop.f32.mrb[0].mxu0
    %169 = vmatprep.mubr.f32.mxu0 0.0
    %170 = vmatmul.mubr.f32.gmra.mrb[0].mxu0 %v84
    %v171 = vpop.f32.mrb[0].mxu0
    %v172 = vadd.f32 0.0, %v171
    %v173 = vpop.f32.mrb[0].mxu0
    %174 = vdwg.mxu0
    %v175 = vsel %vm77, %v51, 0
    %v177 = vsel %vm77, %v52, 0
    %v179 = vsel %vm77, %v54, 0
    %v181 = vsel %vm77, %v55, 0
    %v184 = vsel %vm86, %v57, 0
    %186 = vmatprep.subr.mxu0 0.0
    %187 = vmatpush1.msra.mxu0 %v184
    %188 = vmatprep.subr.mxu0 0.0
    %189 = vmatpush1.msra.mxu0 0.0
    %190 = vmatprep.subr.mxu0 0.0
    %191 = vmatpush1.msra.mxu0 0.0
    %192 = vmatprep.subr.mxu0 0.0
    %193 = vmatpush1.msra.mxu0 0.0
    %194 = vmatprep.subr.mxu0 0.0
    %195 = vmatpush1.msra.mxu0 0.0
    %196 = vmatprep.subr.mxu0 0.0
    %197 = vmatpush1.msra.mxu0 0.0
    %198 = vmatprep.subr.mxu0 0.0
    %199 = vmatpush1.msra.mxu0 0.0
    %200 = vmatprep.subr.mxu0 0.0
    %201 = vmatpush1.msra.mxu0 0.0
    %202 = vmatprep.subr.mxu0 0.0
    %203 = vmatpush1.msra.mxu0 0.0
    %204 = vmatprep.subr.mxu0 0.0
    %205 = vmatpush1.msra.mxu0 0.0
    %206 = vmatprep.subr.mxu0 0.0
    %207 = vmatpush1.msra.mxu0 0.0
    %208 = vmatprep.subr.mxu0 0.0
    %209 = vmatpush1.msra.mxu0 0.0
    %210 = vmatprep.subr.mxu0 0.0
    %211 = vmatpush1.msra.mxu0 0.0
    %212 = vmatprep.subr.mxu0 0.0
    %213 = vmatpush1.msra.mxu0 0.0
    %214 = vmatprep.subr.mxu0 0.0
    %215 = vmatpush1.msra.mxu0 0.0
    %216 = vmatprep.subr.mxu0 0.0
    %217 = vmatpush1.msra.mxu0 0.0
    %218 = vmatprep.subr.mxu0 0.0
    %219 = vmatpush1.msra.mxu0 0.0
    %220 = vmatprep.subr.mxu0 0.0
    %221 = vmatpush1.msra.mxu0 0.0
    %222 = vmatprep.subr.mxu0 0.0
    %223 = vmatpush1.msra.mxu0 0.0
    %224 = vmatprep.subr.mxu0 0.0
    %225 = vmatpush1.msra.mxu0 0.0
    %226 = vmatprep.subr.mxu0 0.0
    %227 = vmatpush1.msra.mxu0 0.0
    %228 = vmatprep.subr.mxu0 0.0
    %229 = vmatpush1.msra.mxu0 0.0
    %230 = vmatprep.subr.mxu0 0.0
    %231 = vmatpush1.msra.mxu0 0.0
    %232 = vmatprep.subr.mxu0 0.0
    %233 = vmatpush1.msra.mxu0 0.0
    %234 = vmatprep.subr.mxu0 0.0
    %235 = vmatpush1.msra.mxu0 0.0
    %236 = vmatprep.subr.mxu0 0.0
    %237 = vmatpush1.msra.mxu0 0.0
    %238 = vmatprep.subr.mxu0 0.0
    %239 = vmatpush1.msra.mxu0 0.0
    %240 = vmatprep.subr.mxu0 0.0
    %241 = vmatpush1.msra.mxu0 0.0
    %242 = vmatprep.subr.mxu0 0.0
    %243 = vmatpush1.msra.mxu0 0.0
    %244 = vmatprep.subr.mxu0 0.0
    %245 = vmatpush1.msra.mxu0 0.0
    %246 = vmatprep.subr.mxu0 0.0
    %247 = vmatpush1.msra.mxu0 0.0
    %248 = vmatprep.subr.mxu0 0.0
    %249 = vmatpush1.msra.mxu0 0.0
    %250 = vmatprep.mubr.f32.mxu0 0.0
    %251 = vmatmul.mubr.f32.gmra.mrb[0].mxu0 %v175
    %v252 = vpop.f32.mrb[0].mxu0
    %v253 = vadd.f32 %v157, %v252
    %v254 = vpop.f32.mrb[0].mxu0
    %255 = vmatprep.mubr.f32.mxu0 0.0
    %256 = vmatmul.mubr.f32.gmra.mrb[0].mxu0 %v177
    %v257 = vpop.f32.mrb[0].mxu0
    %v258 = vadd.f32 %v162, %v257
    %v259 = vpop.f32.mrb[0].mxu0
    %260 = vmatprep.mubr.f32.mxu0 0.0
    %261 = vmatmul.mubr.f32.gmra.mrb[0].mxu0 %v179
    %v262 = vpop.f32.mrb[0].mxu0
    %v263 = vadd.f32 %v167, %v262
    %v264 = vpop.f32.mrb[0].mxu0
    %265 = vmatprep.mubr.f32.mxu0 0.0
    %266 = vmatmul.mubr.f32.gmra.mrb[0].mxu0 %v181
    %v267 = vpop.f32.mrb[0].mxu0
    %v268 = vadd.f32 %v172, %v267
    %v269 = vpop.f32.mrb[0].mxu0
    %270 = vdwg.mxu0
    %vm271 = vcmask 1045504
    %v272 = vrot.slane %v51, 2
    %v273 = vrot.slane %v52, 2
    %v274 = vsel %vm271, %v272, %v273
    %v275 = vrot.slane %v53, 2
    %v276 = vsel %vm271, %v273, %v275
    %v277 = vrot.slane %v54, 2
    %v278 = vrot.slane %v55, 2
    %v279 = vsel %vm271, %v277, %v278
    %v280 = vrot.slane %v56, 2
    %v281 = vsel %vm271, %v278, %v280
    %s282 = scalar_lea.vmem %s2, 8
    %v283 = vld [vmem:[%s282] sm:$0xf]
    %v284 = vsel %vm77, %v274, 0
    %v286 = vsel %vm77, %v276, 0
    %v288 = vsel %vm77, %v279, 0
    %v290 = vsel %vm77, %v281, 0
    %v293 = vsel %vm86, %v283, 0
    %295 = vmatprep.subr.mxu0 0.0
    %296 = vmatpush1.msra.mxu0 %v293
    %297 = vmatprep.subr.mxu0 0.0
    %298 = vmatpush1.msra.mxu0 0.0
    %299 = vmatprep.subr.mxu0 0.0
    %300 = vmatpush1.msra.mxu0 0.0
    %301 = vmatprep.subr.mxu0 0.0
    %302 = vmatpush1.msra.mxu0 0.0
    %303 = vmatprep.subr.mxu0 0.0
    %304 = vmatpush1.msra.mxu0 0.0
    %305 = vmatprep.subr.mxu0 0.0
    %306 = vmatpush1.msra.mxu0 0.0
    %307 = vmatprep.subr.mxu0 0.0
    %308 = vmatpush1.msra.mxu0 0.0
    %309 = vmatprep.subr.mxu0 0.0
    %310 = vmatpush1.msra.mxu0 0.0
    %311 = vmatprep.subr.mxu0 0.0
    %312 = vmatpush1.msra.mxu0 0.0
    %313 = vmatprep.subr.mxu0 0.0
    %314 = vmatpush1.msra.mxu0 0.0
    %315 = vmatprep.subr.mxu0 0.0
    %316 = vmatpush1.msra.mxu0 0.0
    %317 = vmatprep.subr.mxu0 0.0
    %318 = vmatpush1.msra.mxu0 0.0
    %319 = vmatprep.subr.mxu0 0.0
    %320 = vmatpush1.msra.mxu0 0.0
    %321 = vmatprep.subr.mxu0 0.0
    %322 = vmatpush1.msra.mxu0 0.0
    %323 = vmatprep.subr.mxu0 0.0
    %324 = vmatpush1.msra.mxu0 0.0
    %325 = vmatprep.subr.mxu0 0.0
    %326 = vmatpush1.msra.mxu0 0.0
    %327 = vmatprep.subr.mxu0 0.0
    %328 = vmatpush1.msra.mxu0 0.0
    %329 = vmatprep.subr.mxu0 0.0
    %330 = vmatpush1.msra.mxu0 0.0
    %331 = vmatprep.subr.mxu0 0.0
    %332 = vmatpush1.msra.mxu0 0.0
    %333 = vmatprep.subr.mxu0 0.0
    %334 = vmatpush1.msra.mxu0 0.0
    %335 = vmatprep.subr.mxu0 0.0
    %336 = vmatpush1.msra.mxu0 0.0
    %337 = vmatprep.subr.mxu0 0.0
    %338 = vmatpush1.msra.mxu0 0.0
    %339 = vmatprep.subr.mxu0 0.0
    %340 = vmatpush1.msra.mxu0 0.0
    %341 = vmatprep.subr.mxu0 0.0
    %342 = vmatpush1.msra.mxu0 0.0
    %343 = vmatprep.subr.mxu0 0.0
    %344 = vmatpush1.msra.mxu0 0.0
    %345 = vmatprep.subr.mxu0 0.0
    %346 = vmatpush1.msra.mxu0 0.0
    %347 = vmatprep.subr.mxu0 0.0
    %348 = vmatpush1.msra.mxu0 0.0
    %349 = vmatprep.subr.mxu0 0.0
    %350 = vmatpush1.msra.mxu0 0.0
    %351 = vmatprep.subr.mxu0 0.0
    %352 = vmatpush1.msra.mxu0 0.0
    %353 = vmatprep.subr.mxu0 0.0
    %354 = vmatpush1.msra.mxu0 0.0
    %355 = vmatprep.subr.mxu0 0.0
    %356 = vmatpush1.msra.mxu0 0.0
    %357 = vmatprep.subr.mxu0 0.0
    %358 = vmatpush1.msra.mxu0 0.0
    %359 = vmatprep.mubr.f32.mxu0 0.0
    %360 = vmatmul.mubr.f32.gmra.mrb[0].mxu0 %v284
    %v361 = vpop.f32.mrb[0].mxu0
    %v362 = vadd.f32 0.0, %v361
    %v363 = vpop.f32.mrb[0].mxu0
    %364 = vmatprep.mubr.f32.mxu0 0.0
    %365 = vmatmul.mubr.f32.gmra.mrb[0].mxu0 %v286
    %v366 = vpop.f32.mrb[0].mxu0
    %v367 = vadd.f32 0.0, %v366
    %v368 = vpop.f32.mrb[0].mxu0
    %369 = vmatprep.mubr.f32.mxu0 0.0
    %370 = vmatmul.mubr.f32.gmra.mrb[0].mxu0 %v288
    %v371 = vpop.f32.mrb[0].mxu0
    %v372 = vadd.f32 0.0, %v371
    %v373 = vpop.f32.mrb[0].mxu0
    %374 = vmatprep.mubr.f32.mxu0 0.0
    %375 = vmatmul.mubr.f32.gmra.mrb[0].mxu0 %v290
    %v376 = vpop.f32.mrb[0].mxu0
    %v377 = vadd.f32 0.0, %v376
    %v378 = vpop.f32.mrb[0].mxu0
    %379 = vdwg.mxu0
    %v380 = vadd.f32 %v253, %v362
    %v381 = vadd.f32 %v258, %v367
    %v382 = vadd.f32 %v263, %v372
    %v383 = vadd.f32 %v268, %v377
    %vm384 = vcmask 1044480
    %v385 = vrot.slane %v51, 3
    %v386 = vrot.slane %v52, 3
    %v387 = vsel %vm384, %v385, %v386
    %v388 = vrot.slane %v53, 3
    %v389 = vsel %vm384, %v386, %v388
    %v390 = vrot.slane %v54, 3
    %v391 = vrot.slane %v55, 3
    %v392 = vsel %vm384, %v390, %v391
    %v393 = vrot.slane %v56, 3
    %v394 = vsel %vm384, %v391, %v393
    %s395 = scalar_lea.vmem %s2, 12
    %v396 = vld [vmem:[%s395] sm:$0xf]
    %v397 = vsel %vm77, %v387, 0
    %v399 = vsel %vm77, %v389, 0
    %v401 = vsel %vm77, %v392, 0
    %v403 = vsel %vm77, %v394, 0
    %v406 = vsel %vm86, %v396, 0
    %408 = vmatprep.subr.mxu0 0.0
    %409 = vmatpush1.msra.mxu0 %v406
    %410 = vmatprep.subr.mxu0 0.0
    %411 = vmatpush1.msra.mxu0 0.0
    %412 = vmatprep.subr.mxu0 0.0
    %413 = vmatpush1.msra.mxu0 0.0
    %414 = vmatprep.subr.mxu0 0.0
    %415 = vmatpush1.msra.mxu0 0.0
    %416 = vmatprep.subr.mxu0 0.0
    %417 = vmatpush1.msra.mxu0 0.0
    %418 = vmatprep.subr.mxu0 0.0
    %419 = vmatpush1.msra.mxu0 0.0
    %420 = vmatprep.subr.mxu0 0.0
    %421 = vmatpush1.msra.mxu0 0.0
    %422 = vmatprep.subr.mxu0 0.0
    %423 = vmatpush1.msra.mxu0 0.0
    %424 = vmatprep.subr.mxu0 0.0
    %425 = vmatpush1.msra.mxu0 0.0
    %426 = vmatprep.subr.mxu0 0.0
    %427 = vmatpush1.msra.mxu0 0.0
    %428 = vmatprep.subr.mxu0 0.0
    %429 = vmatpush1.msra.mxu0 0.0
    %430 = vmatprep.subr.mxu0 0.0
    %431 = vmatpush1.msra.mxu0 0.0
    %432 = vmatprep.subr.mxu0 0.0
    %433 = vmatpush1.msra.mxu0 0.0
    %434 = vmatprep.subr.mxu0 0.0
    %435 = vmatpush1.msra.mxu0 0.0
    %436 = vmatprep.subr.mxu0 0.0
    %437 = vmatpush1.msra.mxu0 0.0
    %438 = vmatprep.subr.mxu0 0.0
    %439 = vmatpush1.msra.mxu0 0.0
    %440 = vmatprep.subr.mxu0 0.0
    %441 = vmatpush1.msra.mxu0 0.0
    %442 = vmatprep.subr.mxu0 0.0
    %443 = vmatpush1.msra.mxu0 0.0
    %444 = vmatprep.subr.mxu0 0.0
    %445 = vmatpush1.msra.mxu0 0.0
    %446 = vmatprep.subr.mxu0 0.0
    %447 = vmatpush1.msra.mxu0 0.0
    %448 = vmatprep.subr.mxu0 0.0
    %449 = vmatpush1.msra.mxu0 0.0
    %450 = vmatprep.subr.mxu0 0.0
    %451 = vmatpush1.msra.mxu0 0.0
    %452 = vmatprep.subr.mxu0 0.0
    %453 = vmatpush1.msra.mxu0 0.0
    %454 = vmatprep.subr.mxu0 0.0
    %455 = vmatpush1.msra.mxu0 0.0
    %456 = vmatprep.subr.mxu0 0.0
    %457 = vmatpush1.msra.mxu0 0.0
    %458 = vmatprep.subr.mxu0 0.0
    %459 = vmatpush1.msra.mxu0 0.0
    %460 = vmatprep.subr.mxu0 0.0
    %461 = vmatpush1.msra.mxu0 0.0
    %462 = vmatprep.subr.mxu0 0.0
    %463 = vmatpush1.msra.mxu0 0.0
    %464 = vmatprep.subr.mxu0 0.0
    %465 = vmatpush1.msra.mxu0 0.0
    %466 = vmatprep.subr.mxu0 0.0
    %467 = vmatpush1.msra.mxu0 0.0
    %468 = vmatprep.subr.mxu0 0.0
    %469 = vmatpush1.msra.mxu0 0.0
    %470 = vmatprep.subr.mxu0 0.0
    %471 = vmatpush1.msra.mxu0 0.0
    %472 = vmatprep.mubr.f32.mxu0 0.0
    %473 = vmatmul.mubr.f32.gmra.mrb[0].mxu0 %v397
    %v474 = vpop.f32.mrb[0].mxu0
    %v475 = vadd.f32 0.0, %v474
    %v476 = vpop.f32.mrb[0].mxu0
    %477 = vmatprep.mubr.f32.mxu0 0.0
    %478 = vmatmul.mubr.f32.gmra.mrb[0].mxu0 %v399
    %v479 = vpop.f32.mrb[0].mxu0
    %v480 = vadd.f32 0.0, %v479
    %v481 = vpop.f32.mrb[0].mxu0
    %482 = vmatprep.mubr.f32.mxu0 0.0
    %483 = vmatmul.mubr.f32.gmra.mrb[0].mxu0 %v401
    %v484 = vpop.f32.mrb[0].mxu0
    %v485 = vadd.f32 0.0, %v484
    %v486 = vpop.f32.mrb[0].mxu0
    %487 = vmatprep.mubr.f32.mxu0 0.0
    %488 = vmatmul.mubr.f32.gmra.mrb[0].mxu0 %v403
    %v489 = vpop.f32.mrb[0].mxu0
    %v490 = vadd.f32 0.0, %v489
    %v491 = vpop.f32.mrb[0].mxu0
    %492 = vdwg.mxu0
    %v493 = vadd.f32 %v380, %v475
    %v494 = vadd.f32 %v381, %v480
    %v495 = vadd.f32 %v382, %v485
    %v496 = vadd.f32 %v383, %v490
    %v497 = vrot.slane %v51, 4
    %v498 = vrot.slane %v52, 4
    %v499 = vsel %vm86, %v497, %v498
    %v500 = vrot.slane %v53, 4
    %v501 = vsel %vm86, %v498, %v500
    %v502 = vrot.slane %v54, 4
    %v503 = vrot.slane %v55, 4
    %v504 = vsel %vm86, %v502, %v503
    %v505 = vrot.slane %v56, 4
    %v506 = vsel %vm86, %v503, %v505
    %s507 = scalar_lea.vmem %s2, 16
    %v508 = vld [vmem:[%s507] sm:$0xf]
    %v509 = vsel %vm77, %v499, 0
    %v511 = vsel %vm77, %v501, 0
    %v513 = vsel %vm77, %v504, 0
    %v515 = vsel %vm77, %v506, 0
    %v518 = vsel %vm86, %v508, 0
    %520 = vmatprep.subr.mxu0 0.0
    %521 = vmatpush1.msra.mxu0 %v518
    %522 = vmatprep.subr.mxu0 0.0
    %523 = vmatpush1.msra.mxu0 0.0
    %524 = vmatprep.subr.mxu0 0.0
    %525 = vmatpush1.msra.mxu0 0.0
    %526 = vmatprep.subr.mxu0 0.0
    %527 = vmatpush1.msra.mxu0 0.0
    %528 = vmatprep.subr.mxu0 0.0
    %529 = vmatpush1.msra.mxu0 0.0
    %530 = vmatprep.subr.mxu0 0.0
    %531 = vmatpush1.msra.mxu0 0.0
    %532 = vmatprep.subr.mxu0 0.0
    %533 = vmatpush1.msra.mxu0 0.0
    %534 = vmatprep.subr.mxu0 0.0
    %535 = vmatpush1.msra.mxu0 0.0
    %536 = vmatprep.subr.mxu0 0.0
    %537 = vmatpush1.msra.mxu0 0.0
    %538 = vmatprep.subr.mxu0 0.0
    %539 = vmatpush1.msra.mxu0 0.0
    %540 = vmatprep.subr.mxu0 0.0
    %541 = vmatpush1.msra.mxu0 0.0
    %542 = vmatprep.subr.mxu0 0.0
    %543 = vmatpush1.msra.mxu0 0.0
    %544 = vmatprep.subr.mxu0 0.0
    %545 = vmatpush1.msra.mxu0 0.0
    %546 = vmatprep.subr.mxu0 0.0
    %547 = vmatpush1.msra.mxu0 0.0
    %548 = vmatprep.subr.mxu0 0.0
    %549 = vmatpush1.msra.mxu0 0.0
    %550 = vmatprep.subr.mxu0 0.0
    %551 = vmatpush1.msra.mxu0 0.0
    %552 = vmatprep.subr.mxu0 0.0
    %553 = vmatpush1.msra.mxu0 0.0
    %554 = vmatprep.subr.mxu0 0.0
    %555 = vmatpush1.msra.mxu0 0.0
    %556 = vmatprep.subr.mxu0 0.0
    %557 = vmatpush1.msra.mxu0 0.0
    %558 = vmatprep.subr.mxu0 0.0
    %559 = vmatpush1.msra.mxu0 0.0
    %560 = vmatprep.subr.mxu0 0.0
    %561 = vmatpush1.msra.mxu0 0.0
    %562 = vmatprep.subr.mxu0 0.0
    %563 = vmatpush1.msra.mxu0 0.0
    %564 = vmatprep.subr.mxu0 0.0
    %565 = vmatpush1.msra.mxu0 0.0
    %566 = vmatprep.subr.mxu0 0.0
    %567 = vmatpush1.msra.mxu0 0.0
    %568 = vmatprep.subr.mxu0 0.0
    %569 = vmatpush1.msra.mxu0 0.0
    %570 = vmatprep.subr.mxu0 0.0
    %571 = vmatpush1.msra.mxu0 0.0
    %572 = vmatprep.subr.mxu0 0.0
    %573 = vmatpush1.msra.mxu0 0.0
    %574 = vmatprep.subr.mxu0 0.0
    %575 = vmatpush1.msra.mxu0 0.0
    %576 = vmatprep.subr.mxu0 0.0
    %577 = vmatpush1.msra.mxu0 0.0
    %578 = vmatprep.subr.mxu0 0.0
    %579 = vmatpush1.msra.mxu0 0.0
    %580 = vmatprep.subr.mxu0 0.0
    %581 = vmatpush1.msra.mxu0 0.0
    %582 = vmatprep.subr.mxu0 0.0
    %583 = vmatpush1.msra.mxu0 0.0
    %584 = vmatprep.mubr.f32.mxu0 0.0
    %585 = vmatmul.mubr.f32.gmra.mrb[0].mxu0 %v509
    %v586 = vpop.f32.mrb[0].mxu0
    %v587 = vadd.f32 0.0, %v586
    %v588 = vpop.f32.mrb[0].mxu0
    %589 = vmatprep.mubr.f32.mxu0 0.0
    %590 = vmatmul.mubr.f32.gmra.mrb[0].mxu0 %v511
    %v591 = vpop.f32.mrb[0].mxu0
    %v592 = vadd.f32 0.0, %v591
    %v593 = vpop.f32.mrb[0].mxu0
    %594 = vmatprep.mubr.f32.mxu0 0.0
    %595 = vmatmul.mubr.f32.gmra.mrb[0].mxu0 %v513
    %v596 = vpop.f32.mrb[0].mxu0
    %v597 = vadd.f32 0.0, %v596
    %v598 = vpop.f32.mrb[0].mxu0
    %599 = vmatprep.mubr.f32.mxu0 0.0
    %600 = vmatmul.mubr.f32.gmra.mrb[0].mxu0 %v515
    %v601 = vpop.f32.mrb[0].mxu0
    %v602 = vadd.f32 0.0, %v601
    %v603 = vpop.f32.mrb[0].mxu0
    %604 = vdwg.mxu0
    %v605 = vadd.f32 %v493, %v587
    %v606 = vadd.f32 %v494, %v592
    %v607 = vadd.f32 %v495, %v597
    %v608 = vadd.f32 %v496, %v602
    %v609 = vlaneseq
    %v610 = vshrl.u32 %v609, 7
    %v611 = vsub.s32 0, %v610
    %v612 = vrot.slane %v38, %v611
    %v613 = vadd.f32 %v605, %v612
    %v614 = vadd.f32 %v606, %v612
    %v615 = vadd.f32 %v607, %v612
    %v616 = vadd.f32 %v608, %v612
    %v617 = vlaneseq
    %v618 = vshrl.u32 %v617, 7
    %v619 = vsub.s32 0, %v618
    %v620 = vrot.slane %v44, %v619
    %622 = vrot.lane.b32.xlu0 %v620, 8
    %v623 = vpop.permute.xlu0 %622
    %v625 = vadd.f32 %v605, %v623
    %v626 = vadd.f32 %v606, %v623
    %v627 = vadd.f32 %v607, %v623
    %v628 = vadd.f32 %v608, %v623
    %vm629 = vcmask 64512
    %v630 = vsel %vm629, %v613, 0.0
    %v631 = vsel %vm629, %v614, 0.0
    %v632 = vadd.f32 %v630, %v631
    %v633 = vrot.slane %v632, 4
    %v634 = vadd.f32 %v632, %v633
    %v635 = vrot.slane %v634, 2
    %v636 = vadd.f32 %v634, %v635
    %v637 = vrot.slane %v636, 1
    %v638 = vadd.f32 %v636, %v637
    %v639 = vsel %vm629, %v615, 0.0
    %v640 = vsel %vm629, %v616, 0.0
    %v641 = vadd.f32 %v639, %v640
    %v642 = vrot.slane %v641, 4
    %v643 = vadd.f32 %v641, %v642
    %v644 = vrot.slane %v643, 2
    %v645 = vadd.f32 %v643, %v644
    %v646 = vrot.slane %v645, 1
    %v647 = vadd.f32 %v645, %v646
    %v648 = vmul.f32 %v613, %v613
    %v649 = vmul.f32 %v614, %v614
    %v650 = vmul.f32 %v615, %v615
    %v651 = vmul.f32 %v616, %v616
    %v652 = vsel %vm629, %v648, 0.0
    %v653 = vsel %vm629, %v649, 0.0
    %v654 = vadd.f32 %v652, %v653
    %v655 = vrot.slane %v654, 4
    %v656 = vadd.f32 %v654, %v655
    %v657 = vrot.slane %v656, 2
    %v658 = vadd.f32 %v656, %v657
    %v659 = vrot.slane %v658, 1
    %v660 = vadd.f32 %v658, %v659
    %v661 = vsel %vm629, %v650, 0.0
    %v662 = vsel %vm629, %v651, 0.0
    %v663 = vadd.f32 %v661, %v662
    %v664 = vrot.slane %v663, 4
    %v665 = vadd.f32 %v663, %v664
    %v666 = vrot.slane %v665, 2
    %v667 = vadd.f32 %v665, %v666
    %v668 = vrot.slane %v667, 1
    %v669 = vadd.f32 %v667, %v668
    %vm672 = vcmask 1041409
    %v673 = vsel %vm672, %v647, %v638
    %v674 = vsel %vm629, %v673, 0
    %676 = vmatprep.subr.mxu0 0.0
    %677 = vmatpush1.msra.mxu0 %v37
    %678 = vmatprep.subr.mxu0 0.0
    %679 = vmatpush1.msra.mxu0 0.0
    %680 = vmatprep.subr.mxu0 0.0
    %681 = vmatpush1.msra.mxu0 0.0
    %682 = vmatprep.subr.mxu0 0.0
    %683 = vmatpush1.msra.mxu0 0.0
    %684 = vmatprep.subr.mxu0 0.0
    %685 = vmatpush1.msra.mxu0 0.0
    %686 = vmatprep.subr.mxu0 0.0
    %687 = vmatpush1.msra.mxu0 0.0
    %688 = vmatprep.subr.mxu0 0.0
    %689 = vmatpush1.msra.mxu0 0.0
    %690 = vmatprep.subr.mxu0 0.0
    %691 = vmatpush1.msra.mxu0 0.0
    %692 = vmatprep.subr.mxu0 0.0
    %693 = vmatpush1.msra.mxu0 0.0
    %694 = vmatprep.subr.mxu0 0.0
    %695 = vmatpush1.msra.mxu0 0.0
    %696 = vmatprep.subr.mxu0 0.0
    %697 = vmatpush1.msra.mxu0 0.0
    %698 = vmatprep.subr.mxu0 0.0
    %699 = vmatpush1.msra.mxu0 0.0
    %700 = vmatprep.subr.mxu0 0.0
    %701 = vmatpush1.msra.mxu0 0.0
    %702 = vmatprep.subr.mxu0 0.0
    %703 = vmatpush1.msra.mxu0 0.0
    %704 = vmatprep.subr.mxu0 0.0
    %705 = vmatpush1.msra.mxu0 0.0
    %706 = vmatprep.subr.mxu0 0.0
    %707 = vmatpush1.msra.mxu0 0.0
    %708 = vmatprep.subr.mxu0 0.0
    %709 = vmatpush1.msra.mxu0 0.0
    %710 = vmatprep.subr.mxu0 0.0
    %711 = vmatpush1.msra.mxu0 0.0
    %712 = vmatprep.subr.mxu0 0.0
    %713 = vmatpush1.msra.mxu0 0.0
    %714 = vmatprep.subr.mxu0 0.0
    %715 = vmatpush1.msra.mxu0 0.0
    %716 = vmatprep.subr.mxu0 0.0
    %717 = vmatpush1.msra.mxu0 0.0
    %718 = vmatprep.subr.mxu0 0.0
    %719 = vmatpush1.msra.mxu0 0.0
    %720 = vmatprep.subr.mxu0 0.0
    %721 = vmatpush1.msra.mxu0 0.0
    %722 = vmatprep.subr.mxu0 0.0
    %723 = vmatpush1.msra.mxu0 0.0
    %724 = vmatprep.subr.mxu0 0.0
    %725 = vmatpush1.msra.mxu0 0.0
    %726 = vmatprep.subr.mxu0 0.0
    %727 = vmatpush1.msra.mxu0 0.0
    %728 = vmatprep.subr.mxu0 0.0
    %729 = vmatpush1.msra.mxu0 0.0
    %730 = vmatprep.subr.mxu0 0.0
    %731 = vmatpush1.msra.mxu0 0.0
    %732 = vmatprep.subr.mxu0 0.0
    %733 = vmatpush1.msra.mxu0 0.0
    %734 = vmatprep.subr.mxu0 0.0
    %735 = vmatpush1.msra.mxu0 0.0
    %736 = vmatprep.subr.mxu0 0.0
    %737 = vmatpush1.msra.mxu0 0.0
    %738 = vmatprep.subr.mxu0 0.0
    %739 = vmatpush1.msra.mxu0 0.0
    %740 = vmatprep.mubr.f32.mxu0 0.0
    %741 = vmatmul.mubr.f32.gmra.mrb[0].mxu0 %v674
    %v742 = vpop.f32.mrb[0].mxu0
    %v743 = vadd.f32 0.0, %v742
    %v744 = vpop.f32.mrb[0].mxu0
    %745 = vdwg.mxu0
    %v748 = vsel %vm672, %v669, %v660
    %v749 = vsel %vm629, %v748, 0
    %751 = vmatprep.subr.mxu0 0.0
    %752 = vmatpush1.msra.mxu0 %v37
    %753 = vmatprep.subr.mxu0 0.0
    %754 = vmatpush1.msra.mxu0 0.0
    %755 = vmatprep.subr.mxu0 0.0
    %756 = vmatpush1.msra.mxu0 0.0
    %757 = vmatprep.subr.mxu0 0.0
    %758 = vmatpush1.msra.mxu0 0.0
    %759 = vmatprep.subr.mxu0 0.0
    %760 = vmatpush1.msra.mxu0 0.0
    %761 = vmatprep.subr.mxu0 0.0
    %762 = vmatpush1.msra.mxu0 0.0
    %763 = vmatprep.subr.mxu0 0.0
    %764 = vmatpush1.msra.mxu0 0.0
    %765 = vmatprep.subr.mxu0 0.0
    %766 = vmatpush1.msra.mxu0 0.0
    %767 = vmatprep.subr.mxu0 0.0
    %768 = vmatpush1.msra.mxu0 0.0
    %769 = vmatprep.subr.mxu0 0.0
    %770 = vmatpush1.msra.mxu0 0.0
    %771 = vmatprep.subr.mxu0 0.0
    %772 = vmatpush1.msra.mxu0 0.0
    %773 = vmatprep.subr.mxu0 0.0
    %774 = vmatpush1.msra.mxu0 0.0
    %775 = vmatprep.subr.mxu0 0.0
    %776 = vmatpush1.msra.mxu0 0.0
    %777 = vmatprep.subr.mxu0 0.0
    %778 = vmatpush1.msra.mxu0 0.0
    %779 = vmatprep.subr.mxu0 0.0
    %780 = vmatpush1.msra.mxu0 0.0
    %781 = vmatprep.subr.mxu0 0.0
    %782 = vmatpush1.msra.mxu0 0.0
    %783 = vmatprep.subr.mxu0 0.0
    %784 = vmatpush1.msra.mxu0 0.0
    %785 = vmatprep.subr.mxu0 0.0
    %786 = vmatpush1.msra.mxu0 0.0
    %787 = vmatprep.subr.mxu0 0.0
    %788 = vmatpush1.msra.mxu0 0.0
    %789 = vmatprep.subr.mxu0 0.0
    %790 = vmatpush1.msra.mxu0 0.0
    %791 = vmatprep.subr.mxu0 0.0
    %792 = vmatpush1.msra.mxu0 0.0
    %793 = vmatprep.subr.mxu0 0.0
    %794 = vmatpush1.msra.mxu0 0.0
    %795 = vmatprep.subr.mxu0 0.0
    %796 = vmatpush1.msra.mxu0 0.0
    %797 = vmatprep.subr.mxu0 0.0
    %798 = vmatpush1.msra.mxu0 0.0
    %799 = vmatprep.subr.mxu0 0.0
    %800 = vmatpush1.msra.mxu0 0.0
    %801 = vmatprep.subr.mxu0 0.0
    %802 = vmatpush1.msra.mxu0 0.0
    %803 = vmatprep.subr.mxu0 0.0
    %804 = vmatpush1.msra.mxu0 0.0
    %805 = vmatprep.subr.mxu0 0.0
    %806 = vmatpush1.msra.mxu0 0.0
    %807 = vmatprep.subr.mxu0 0.0
    %808 = vmatpush1.msra.mxu0 0.0
    %809 = vmatprep.subr.mxu0 0.0
    %810 = vmatpush1.msra.mxu0 0.0
    %811 = vmatprep.subr.mxu0 0.0
    %812 = vmatpush1.msra.mxu0 0.0
    %813 = vmatprep.subr.mxu0 0.0
    %814 = vmatpush1.msra.mxu0 0.0
    %815 = vmatprep.mubr.f32.mxu0 0.0
    %816 = vmatmul.mubr.f32.gmra.mrb[0].mxu0 %v749
    %v817 = vpop.f32.mrb[0].mxu0
    %v818 = vadd.f32 0.0, %v817
    %v819 = vpop.f32.mrb[0].mxu0
    %820 = vdwg.mxu0
    %v821 = vmul.f32 %v743, %v743
    %v822 = vsub.f32 %v818, %v821
    %v823 = vmax.f32 %v822, 0.0
    %v824 = vadd.f32 %v823, 1e-05
    %v825 = vrsqrt.pop %v824
    %v828 = vunpack.c.l.s4 1966171168
    %v829 = vunpack.c.0.s8 %v828
    %v830 = vlaneseq
    %v831 = vshrl.u32 %v830, 7
    %v832 = vsub.s32 %v829, %v831
    %v833 = vrot.slane %v743, %v832
    %v834 = vcombine.high %v833, %v833
    %v836 = vunpack.c.l.s4 1966171168
    %v837 = vunpack.c.0.s8 %v836
    %v838 = vlaneseq
    %v839 = vshrl.u32 %v838, 7
    %v840 = vsub.s32 %v837, %v839
    %v841 = vrot.slane %v833, %v840
    %v843 = vunpack.c.l.s4 1966171168
    %v844 = vunpack.c.0.s8 %v843
    %v845 = vlaneseq
    %v846 = vshrl.u32 %v845, 7
    %v847 = vsub.s32 %v844, %v846
    %v848 = vrot.slane %v834, %v847
    %v849 = vlaneseq
    %v850 = vshrl.u32 %v849, 7
    %v851 = vsub.s32 0, %v850
    %v852 = vrot.slane %v841, %v851
    %v853 = vlaneseq
    %v854 = vshrl.u32 %v853, 7
    %v855 = vsub.s32 0, %v854
    %v856 = vrot.slane %v848, %v855
    %v859 = vsub.f32 %v613, %v852
    %v860 = vsub.f32 %v614, %v852
    %v861 = vsub.f32 %v615, %v856
    %v862 = vsub.f32 %v616, %v856
    %v865 = vunpack.c.l.s4 1966171168
    %v866 = vunpack.c.0.s8 %v865
    %v867 = vlaneseq
    %v868 = vshrl.u32 %v867, 7
    %v869 = vsub.s32 %v866, %v868
    %v870 = vrot.slane %v825, %v869
    %v871 = vcombine.high %v870, %v870
    %v873 = vunpack.c.l.s4 1966171168
    %v874 = vunpack.c.0.s8 %v873
    %v875 = vlaneseq
    %v876 = vshrl.u32 %v875, 7
    %v877 = vsub.s32 %v874, %v876
    %v878 = vrot.slane %v870, %v877
    %v880 = vunpack.c.l.s4 1966171168
    %v881 = vunpack.c.0.s8 %v880
    %v882 = vlaneseq
    %v883 = vshrl.u32 %v882, 7
    %v884 = vsub.s32 %v881, %v883
    %v885 = vrot.slane %v871, %v884
    %v886 = vlaneseq
    %v887 = vshrl.u32 %v886, 7
    %v888 = vsub.s32 0, %v887
    %v889 = vrot.slane %v878, %v888
    %v890 = vlaneseq
    %v891 = vshrl.u32 %v890, 7
    %v892 = vsub.s32 0, %v891
    %v893 = vrot.slane %v885, %v892
    %v896 = vmul.f32 %v859, %v889
    %v897 = vmul.f32 %v860, %v889
    %v898 = vmul.f32 %v861, %v893
    %v899 = vmul.f32 %v862, %v893
    %v900 = vlaneseq
    %v901 = vshrl.u32 %v900, 7
    %v902 = vsub.s32 0, %v901
    %v903 = vrot.slane %v39, %v902
    %v904 = vmul.f32 %v896, %v903
    %v905 = vmul.f32 %v897, %v903
    %v906 = vmul.f32 %v898, %v903
    %v907 = vmul.f32 %v899, %v903
    %v908 = vlaneseq
    %v909 = vshrl.u32 %v908, 7
    %v910 = vsub.s32 0, %v909
    %v911 = vrot.slane %v40, %v910
    %v912 = vadd.f32 %v904, %v911
    %v913 = vadd.f32 %v905, %v911
    %v914 = vadd.f32 %v906, %v911
    %v915 = vadd.f32 %v907, %v911
    %v916 = vmin.f32 %v912, 20.0
    %v917 = vmin.f32 %v913, 20.0
    %v918 = vmin.f32 %v914, 20.0
    %v919 = vmin.f32 %v915, 20.0
    %v920 = vmul.f32 %v916, 1.442695
    %v921 = vpow.pop %v920
    %v922 = vmul.f32 %v917, 1.442695
    %v923 = vpow.pop %v922
    %v924 = vmul.f32 %v918, 1.442695
    %v925 = vpow.pop %v924
    %v926 = vmul.f32 %v919, 1.442695
    %v927 = vpow.pop %v926
    %v928 = vadd.f32 %v921, 2.0
    %v929 = vadd.f32 %v923, 2.0
    %v930 = vadd.f32 %v925, 2.0
    %v931 = vadd.f32 %v927, 2.0
    %v932 = vmul.f32 %v921, %v928
    %v933 = vmul.f32 %v923, %v929
    %v934 = vmul.f32 %v925, %v930
    %v935 = vmul.f32 %v927, %v931
    %v936 = vmul.f32 %v912, %v932
    %v937 = vmul.f32 %v913, %v933
    %v938 = vmul.f32 %v914, %v934
    %v939 = vmul.f32 %v915, %v935
    %v940 = vadd.f32 %v932, 2.0
    %v941 = vadd.f32 %v933, 2.0
    %v942 = vadd.f32 %v934, 2.0
    %v943 = vadd.f32 %v935, 2.0
    %v944 = vrcp.pop %v940
    %v945 = vrcp.pop %v941
    %v946 = vrcp.pop %v942
    %v947 = vrcp.pop %v943
    %v948 = vmul.f32 %v936, %v944
    %v949 = vmul.f32 %v937, %v945
    %v950 = vmul.f32 %v938, %v946
    %v951 = vmul.f32 %v939, %v947
    %v952 = vld [vmem:[%s1] sm:$0x1]
    %v953 = vld [vmem:[%s1 + $0x1] sm:$0x1]
    %v956 = vlaneseq
    %v957 = vshrl.u32 %v956, 7
    %v958 = vsub.s32 0, %v957
    %v959 = vrot.slane %v952, %v958
    %v960 = vlaneseq
    %v961 = vshrl.u32 %v960, 7
    %v962 = vsub.s32 0, %v961
    %v963 = vrot.slane %v953, %v962
    %v966 = vadd.f32 %v948, %v959
    %v967 = vadd.f32 %v949, %v959
    %v968 = vadd.f32 %v950, %v963
    %v969 = vadd.f32 %v951, %v963
    %970 = vst.msk [vmem:[#allocation2 + $0x2] sm:$0xff] %vm629, %v966
    %971 = vst.msk [vmem:[#allocation2 + $0xa] sm:$0xff] %vm629, %v967
    %972 = vst.msk [vmem:[#allocation2 + $0x1a] sm:$0xff] %vm629, %v968
    %973 = vst.msk [vmem:[#allocation2 + $0x22] sm:$0xff] %vm629, %v969
    %vm974 = vcmask 58368
    %975 = vst.msk [vmem:[#allocation2] sm:$0x3] %vm974, 0.0
    %976 = vst.msk [vmem:[#allocation2 + $0x18] sm:$0x3] %vm974, 0.0
    %977 = vst.msk [vmem:[#allocation2 + $0x12] sm:$0x3] %vm974, 0.0
    %978 = vst.msk [vmem:[#allocation2 + $0x2a] sm:$0x3] %vm974, 0.0
    %v979 = vld [vmem:[#allocation2] sm:$0xff]
    %v980 = vld [vmem:[#allocation2 + $0x8] sm:$0xff]
    %v981 = vld [vmem:[#allocation2 + $0x10] sm:$0xf]
    %v982 = vld [vmem:[#allocation2 + $0x18] sm:$0xff]
    %v983 = vld [vmem:[#allocation2 + $0x20] sm:$0xff]
    %v984 = vld [vmem:[#allocation2 + $0x28] sm:$0xf]
    %v985 = vld [vmem:[#allocation3] sm:$0xff]
    %v992 = vrot.slane %v979, 1
    %v993 = vrot.slane %v980, 1
    %v994 = vsel %vm64, %v992, %v993
    %v995 = vrot.slane %v981, 1
    %v996 = vsel %vm64, %v993, %v995
    %v997 = vrot.slane %v982, 1
    %v998 = vrot.slane %v983, 1
    %v999 = vsel %vm64, %v997, %v998
    %v1000 = vrot.slane %v984, 1
    %v1001 = vsel %vm64, %v998, %v1000
    %s1002 = scalar_lea.vmem [#allocation3], 8
    %v1003 = vld [vmem:[%s1002] sm:$0xff]
    %v1004 = vsel %vm629, %v994, 0
    %v1006 = vsel %vm629, %v996, 0
    %v1008 = vsel %vm629, %v999, 0
    %v1010 = vsel %vm629, %v1001, 0
    %1012 = vmatprep.subr.mxu0 0.0
    %1013 = vmatpush1.msra.mxu0 %v1003
    %1014 = vmatprep.subr.mxu0 0.0
    %1015 = vmatpush1.msra.mxu0 0.0
    %1016 = vmatprep.subr.mxu0 0.0
    %1017 = vmatpush1.msra.mxu0 0.0
    %1018 = vmatprep.subr.mxu0 0.0
    %1019 = vmatpush1.msra.mxu0 0.0
    %1020 = vmatprep.subr.mxu0 0.0
    %1021 = vmatpush1.msra.mxu0 0.0
    %1022 = vmatprep.subr.mxu0 0.0
    %1023 = vmatpush1.msra.mxu0 0.0
    %1024 = vmatprep.subr.mxu0 0.0
    %1025 = vmatpush1.msra.mxu0 0.0
    %1026 = vmatprep.subr.mxu0 0.0
    %1027 = vmatpush1.msra.mxu0 0.0
    %1028 = vmatprep.subr.mxu0 0.0
    %1029 = vmatpush1.msra.mxu0 0.0
    %1030 = vmatprep.subr.mxu0 0.0
    %1031 = vmatpush1.msra.mxu0 0.0
    %1032 = vmatprep.subr.mxu0 0.0
    %1033 = vmatpush1.msra.mxu0 0.0
    %1034 = vmatprep.subr.mxu0 0.0
    %1035 = vmatpush1.msra.mxu0 0.0
    %1036 = vmatprep.subr.mxu0 0.0
    %1037 = vmatpush1.msra.mxu0 0.0
    %1038 = vmatprep.subr.mxu0 0.0
    %1039 = vmatpush1.msra.mxu0 0.0
    %1040 = vmatprep.subr.mxu0 0.0
    %1041 = vmatpush1.msra.mxu0 0.0
    %1042 = vmatprep.subr.mxu0 0.0
    %1043 = vmatpush1.msra.mxu0 0.0
    %1044 = vmatprep.subr.mxu0 0.0
    %1045 = vmatpush1.msra.mxu0 0.0
    %1046 = vmatprep.subr.mxu0 0.0
    %1047 = vmatpush1.msra.mxu0 0.0
    %1048 = vmatprep.subr.mxu0 0.0
    %1049 = vmatpush1.msra.mxu0 0.0
    %1050 = vmatprep.subr.mxu0 0.0
    %1051 = vmatpush1.msra.mxu0 0.0
    %1052 = vmatprep.subr.mxu0 0.0
    %1053 = vmatpush1.msra.mxu0 0.0
    %1054 = vmatprep.subr.mxu0 0.0
    %1055 = vmatpush1.msra.mxu0 0.0
    %1056 = vmatprep.subr.mxu0 0.0
    %1057 = vmatpush1.msra.mxu0 0.0
    %1058 = vmatprep.subr.mxu0 0.0
    %1059 = vmatpush1.msra.mxu0 0.0
    %1060 = vmatprep.subr.mxu0 0.0
    %1061 = vmatpush1.msra.mxu0 0.0
    %1062 = vmatprep.subr.mxu0 0.0
    %1063 = vmatpush1.msra.mxu0 0.0
    %1064 = vmatprep.subr.mxu0 0.0
    %1065 = vmatpush1.msra.mxu0 0.0
    %1066 = vmatprep.subr.mxu0 0.0
    %1067 = vmatpush1.msra.mxu0 0.0
    %1068 = vmatprep.subr.mxu0 0.0
    %1069 = vmatpush1.msra.mxu0 0.0
    %1070 = vmatprep.subr.mxu0 0.0
    %1071 = vmatpush1.msra.mxu0 0.0
    %1072 = vmatprep.subr.mxu0 0.0
    %1073 = vmatpush1.msra.mxu0 0.0
    %1074 = vmatprep.subr.mxu0 0.0
    %1075 = vmatpush1.msra.mxu0 0.0
    %1076 = vmatprep.mubr.f32.mxu0 0.0
    %1077 = vmatmul.mubr.f32.gmra.mrb[0].mxu0 %v1004
    %v1078 = vpop.f32.mrb[0].mxu0
    %v1079 = vadd.f32 0.0, %v1078
    %v1080 = vpop.f32.mrb[0].mxu0
    %1081 = vmatprep.mubr.f32.mxu0 0.0
    %1082 = vmatmul.mubr.f32.gmra.mrb[0].mxu0 %v1006
    %v1083 = vpop.f32.mrb[0].mxu0
    %v1084 = vadd.f32 0.0, %v1083
    %v1085 = vpop.f32.mrb[0].mxu0
    %1086 = vmatprep.mubr.f32.mxu0 0.0
    %1087 = vmatmul.mubr.f32.gmra.mrb[0].mxu0 %v1008
    %v1088 = vpop.f32.mrb[0].mxu0
    %v1089 = vadd.f32 0.0, %v1088
    %v1090 = vpop.f32.mrb[0].mxu0
    %1091 = vmatprep.mubr.f32.mxu0 0.0
    %1092 = vmatmul.mubr.f32.gmra.mrb[0].mxu0 %v1010
    %v1093 = vpop.f32.mrb[0].mxu0
    %v1094 = vadd.f32 0.0, %v1093
    %v1095 = vpop.f32.mrb[0].mxu0
    %1096 = vdwg.mxu0
    %v1097 = vsel %vm629, %v979, 0
    %v1099 = vsel %vm629, %v980, 0
    %v1101 = vsel %vm629, %v982, 0
    %v1103 = vsel %vm629, %v983, 0
    %1105 = vmatprep.subr.mxu0 0.0
    %1106 = vmatpush1.msra.mxu0 %v985
    %1107 = vmatprep.subr.mxu0 0.0
    %1108 = vmatpush1.msra.mxu0 0.0
    %1109 = vmatprep.subr.mxu0 0.0
    %1110 = vmatpush1.msra.mxu0 0.0
    %1111 = vmatprep.subr.mxu0 0.0
    %1112 = vmatpush1.msra.mxu0 0.0
    %1113 = vmatprep.subr.mxu0 0.0
    %1114 = vmatpush1.msra.mxu0 0.0
    %1115 = vmatprep.subr.mxu0 0.0
    %1116 = vmatpush1.msra.mxu0 0.0
    %1117 = vmatprep.subr.mxu0 0.0
    %1118 = vmatpush1.msra.mxu0 0.0
    %1119 = vmatprep.subr.mxu0 0.0
    %1120 = vmatpush1.msra.mxu0 0.0
    %1121 = vmatprep.subr.mxu0 0.0
    %1122 = vmatpush1.msra.mxu0 0.0
    %1123 = vmatprep.subr.mxu0 0.0
    %1124 = vmatpush1.msra.mxu0 0.0
    %1125 = vmatprep.subr.mxu0 0.0
    %1126 = vmatpush1.msra.mxu0 0.0
    %1127 = vmatprep.subr.mxu0 0.0
    %1128 = vmatpush1.msra.mxu0 0.0
    %1129 = vmatprep.subr.mxu0 0.0
    %1130 = vmatpush1.msra.mxu0 0.0
    %1131 = vmatprep.subr.mxu0 0.0
    %1132 = vmatpush1.msra.mxu0 0.0
    %1133 = vmatprep.subr.mxu0 0.0
    %1134 = vmatpush1.msra.mxu0 0.0
    %1135 = vmatprep.subr.mxu0 0.0
    %1136 = vmatpush1.msra.mxu0 0.0
    %1137 = vmatprep.subr.mxu0 0.0
    %1138 = vmatpush1.msra.mxu0 0.0
    %1139 = vmatprep.subr.mxu0 0.0
    %1140 = vmatpush1.msra.mxu0 0.0
    %1141 = vmatprep.subr.mxu0 0.0
    %1142 = vmatpush1.msra.mxu0 0.0
    %1143 = vmatprep.subr.mxu0 0.0
    %1144 = vmatpush1.msra.mxu0 0.0
    %1145 = vmatprep.subr.mxu0 0.0
    %1146 = vmatpush1.msra.mxu0 0.0
    %1147 = vmatprep.subr.mxu0 0.0
    %1148 = vmatpush1.msra.mxu0 0.0
    %1149 = vmatprep.subr.mxu0 0.0
    %1150 = vmatpush1.msra.mxu0 0.0
    %1151 = vmatprep.subr.mxu0 0.0
    %1152 = vmatpush1.msra.mxu0 0.0
    %1153 = vmatprep.subr.mxu0 0.0
    %1154 = vmatpush1.msra.mxu0 0.0
    %1155 = vmatprep.subr.mxu0 0.0
    %1156 = vmatpush1.msra.mxu0 0.0
    %1157 = vmatprep.subr.mxu0 0.0
    %1158 = vmatpush1.msra.mxu0 0.0
    %1159 = vmatprep.subr.mxu0 0.0
    %1160 = vmatpush1.msra.mxu0 0.0
    %1161 = vmatprep.subr.mxu0 0.0
    %1162 = vmatpush1.msra.mxu0 0.0
    %1163 = vmatprep.subr.mxu0 0.0
    %1164 = vmatpush1.msra.mxu0 0.0
    %1165 = vmatprep.subr.mxu0 0.0
    %1166 = vmatpush1.msra.mxu0 0.0
    %1167 = vmatprep.subr.mxu0 0.0
    %1168 = vmatpush1.msra.mxu0 0.0
    %1169 = vmatprep.mubr.f32.mxu0 0.0
    %1170 = vmatmul.mubr.f32.gmra.mrb[0].mxu0 %v1097
    %v1171 = vpop.f32.mrb[0].mxu0
    %v1172 = vadd.f32 %v1079, %v1171
    %v1173 = vpop.f32.mrb[0].mxu0
    %1174 = vmatprep.mubr.f32.mxu0 0.0
    %1175 = vmatmul.mubr.f32.gmra.mrb[0].mxu0 %v1099
    %v1176 = vpop.f32.mrb[0].mxu0
    %v1177 = vadd.f32 %v1084, %v1176
    %v1178 = vpop.f32.mrb[0].mxu0
    %1179 = vmatprep.mubr.f32.mxu0 0.0
    %1180 = vmatmul.mubr.f32.gmra.mrb[0].mxu0 %v1101
    %v1181 = vpop.f32.mrb[0].mxu0
    %v1182 = vadd.f32 %v1089, %v1181
    %v1183 = vpop.f32.mrb[0].mxu0
    %1184 = vmatprep.mubr.f32.mxu0 0.0
    %1185 = vmatmul.mubr.f32.gmra.mrb[0].mxu0 %v1103
    %v1186 = vpop.f32.mrb[0].mxu0
    %v1187 = vadd.f32 %v1094, %v1186
    %v1188 = vpop.f32.mrb[0].mxu0
    %1189 = vdwg.mxu0
    %v1190 = vrot.slane %v979, 2
    %v1191 = vrot.slane %v980, 2
    %v1192 = vsel %vm271, %v1190, %v1191
    %v1193 = vrot.slane %v981, 2
    %v1194 = vsel %vm271, %v1191, %v1193
    %v1195 = vrot.slane %v982, 2
    %v1196 = vrot.slane %v983, 2
    %v1197 = vsel %vm271, %v1195, %v1196
    %v1198 = vrot.slane %v984, 2
    %v1199 = vsel %vm271, %v1196, %v1198
    %s1200 = scalar_lea.vmem [#allocation3], 16
    %v1201 = vld [vmem:[%s1200] sm:$0xff]
    %v1202 = vsel %vm629, %v1192, 0
    %v1204 = vsel %vm629, %v1194, 0
    %v1206 = vsel %vm629, %v1197, 0
    %v1208 = vsel %vm629, %v1199, 0
    %1210 = vmatprep.subr.mxu0 0.0
    %1211 = vmatpush1.msra.mxu0 %v1201
    %1212 = vmatprep.subr.mxu0 0.0
    %1213 = vmatpush1.msra.mxu0 0.0
    %1214 = vmatprep.subr.mxu0 0.0
    %1215 = vmatpush1.msra.mxu0 0.0
    %1216 = vmatprep.subr.mxu0 0.0
    %1217 = vmatpush1.msra.mxu0 0.0
    %1218 = vmatprep.subr.mxu0 0.0
    %1219 = vmatpush1.msra.mxu0 0.0
    %1220 = vmatprep.subr.mxu0 0.0
    %1221 = vmatpush1.msra.mxu0 0.0
    %1222 = vmatprep.subr.mxu0 0.0
    %1223 = vmatpush1.msra.mxu0 0.0
    %1224 = vmatprep.subr.mxu0 0.0
    %1225 = vmatpush1.msra.mxu0 0.0
    %1226 = vmatprep.subr.mxu0 0.0
    %1227 = vmatpush1.msra.mxu0 0.0
    %1228 = vmatprep.subr.mxu0 0.0
    %1229 = vmatpush1.msra.mxu0 0.0
    %1230 = vmatprep.subr.mxu0 0.0
    %1231 = vmatpush1.msra.mxu0 0.0
    %1232 = vmatprep.subr.mxu0 0.0
    %1233 = vmatpush1.msra.mxu0 0.0
    %1234 = vmatprep.subr.mxu0 0.0
    %1235 = vmatpush1.msra.mxu0 0.0
    %1236 = vmatprep.subr.mxu0 0.0
    %1237 = vmatpush1.msra.mxu0 0.0
    %1238 = vmatprep.subr.mxu0 0.0
    %1239 = vmatpush1.msra.mxu0 0.0
    %1240 = vmatprep.subr.mxu0 0.0
    %1241 = vmatpush1.msra.mxu0 0.0
    %1242 = vmatprep.subr.mxu0 0.0
    %1243 = vmatpush1.msra.mxu0 0.0
    %1244 = vmatprep.subr.mxu0 0.0
    %1245 = vmatpush1.msra.mxu0 0.0
    %1246 = vmatprep.subr.mxu0 0.0
    %1247 = vmatpush1.msra.mxu0 0.0
    %1248 = vmatprep.subr.mxu0 0.0
    %1249 = vmatpush1.msra.mxu0 0.0
    %1250 = vmatprep.subr.mxu0 0.0
    %1251 = vmatpush1.msra.mxu0 0.0
    %1252 = vmatprep.subr.mxu0 0.0
    %1253 = vmatpush1.msra.mxu0 0.0
    %1254 = vmatprep.subr.mxu0 0.0
    %1255 = vmatpush1.msra.mxu0 0.0
    %1256 = vmatprep.subr.mxu0 0.0
    %1257 = vmatpush1.msra.mxu0 0.0
    %1258 = vmatprep.subr.mxu0 0.0
    %1259 = vmatpush1.msra.mxu0 0.0
    %1260 = vmatprep.subr.mxu0 0.0
    %1261 = vmatpush1.msra.mxu0 0.0
    %1262 = vmatprep.subr.mxu0 0.0
    %1263 = vmatpush1.msra.mxu0 0.0
    %1264 = vmatprep.subr.mxu0 0.0
    %1265 = vmatpush1.msra.mxu0 0.0
    %1266 = vmatprep.subr.mxu0 0.0
    %1267 = vmatpush1.msra.mxu0 0.0
    %1268 = vmatprep.subr.mxu0 0.0
    %1269 = vmatpush1.msra.mxu0 0.0
    %1270 = vmatprep.subr.mxu0 0.0
    %1271 = vmatpush1.msra.mxu0 0.0
    %1272 = vmatprep.subr.mxu0 0.0
    %1273 = vmatpush1.msra.mxu0 0.0
    %1274 = vmatprep.mubr.f32.mxu0 0.0
    %1275 = vmatmul.mubr.f32.gmra.mrb[0].mxu0 %v1202
    %v1276 = vpop.f32.mrb[0].mxu0
    %v1277 = vadd.f32 0.0, %v1276
    %v1278 = vpop.f32.mrb[0].mxu0
    %1279 = vmatprep.mubr.f32.mxu0 0.0
    %1280 = vmatmul.mubr.f32.gmra.mrb[0].mxu0 %v1204
    %v1281 = vpop.f32.mrb[0].mxu0
    %v1282 = vadd.f32 0.0, %v1281
    %v1283 = vpop.f32.mrb[0].mxu0
    %1284 = vmatprep.mubr.f32.mxu0 0.0
    %1285 = vmatmul.mubr.f32.gmra.mrb[0].mxu0 %v1206
    %v1286 = vpop.f32.mrb[0].mxu0
    %v1287 = vadd.f32 0.0, %v1286
    %v1288 = vpop.f32.mrb[0].mxu0
    %1289 = vmatprep.mubr.f32.mxu0 0.0
    %1290 = vmatmul.mubr.f32.gmra.mrb[0].mxu0 %v1208
    %v1291 = vpop.f32.mrb[0].mxu0
    %v1292 = vadd.f32 0.0, %v1291
    %v1293 = vpop.f32.mrb[0].mxu0
    %1294 = vdwg.mxu0
    %v1295 = vadd.f32 %v1172, %v1277
    %v1296 = vadd.f32 %v1177, %v1282
    %v1297 = vadd.f32 %v1182, %v1287
    %v1298 = vadd.f32 %v1187, %v1292
    %v1299 = vrot.slane %v979, 3
    %v1300 = vrot.slane %v980, 3
    %v1301 = vsel %vm384, %v1299, %v1300
    %v1302 = vrot.slane %v981, 3
    %v1303 = vsel %vm384, %v1300, %v1302
    %v1304 = vrot.slane %v982, 3
    %v1305 = vrot.slane %v983, 3
    %v1306 = vsel %vm384, %v1304, %v1305
    %v1307 = vrot.slane %v984, 3
    %v1308 = vsel %vm384, %v1305, %v1307
    %s1309 = scalar_lea.vmem [#allocation3], 24
    %v1310 = vld [vmem:[%s1309] sm:$0xff]
    %v1311 = vsel %vm629, %v1301, 0
    %v1313 = vsel %vm629, %v1303, 0
    %v1315 = vsel %vm629, %v1306, 0
    %v1317 = vsel %vm629, %v1308, 0
    %1319 = vmatprep.subr.mxu0 0.0
    %1320 = vmatpush1.msra.mxu0 %v1310
    %1321 = vmatprep.subr.mxu0 0.0
    %1322 = vmatpush1.msra.mxu0 0.0
    %1323 = vmatprep.subr.mxu0 0.0
    %1324 = vmatpush1.msra.mxu0 0.0
    %1325 = vmatprep.subr.mxu0 0.0
    %1326 = vmatpush1.msra.mxu0 0.0
    %1327 = vmatprep.subr.mxu0 0.0
    %1328 = vmatpush1.msra.mxu0 0.0
    %1329 = vmatprep.subr.mxu0 0.0
    %1330 = vmatpush1.msra.mxu0 0.0
    %1331 = vmatprep.subr.mxu0 0.0
    %1332 = vmatpush1.msra.mxu0 0.0
    %1333 = vmatprep.subr.mxu0 0.0
    %1334 = vmatpush1.msra.mxu0 0.0
    %1335 = vmatprep.subr.mxu0 0.0
    %1336 = vmatpush1.msra.mxu0 0.0
    %1337 = vmatprep.subr.mxu0 0.0
    %1338 = vmatpush1.msra.mxu0 0.0
    %1339 = vmatprep.subr.mxu0 0.0
    %1340 = vmatpush1.msra.mxu0 0.0
    %1341 = vmatprep.subr.mxu0 0.0
    %1342 = vmatpush1.msra.mxu0 0.0
    %1343 = vmatprep.subr.mxu0 0.0
    %1344 = vmatpush1.msra.mxu0 0.0
    %1345 = vmatprep.subr.mxu0 0.0
    %1346 = vmatpush1.msra.mxu0 0.0
    %1347 = vmatprep.subr.mxu0 0.0
    %1348 = vmatpush1.msra.mxu0 0.0
    %1349 = vmatprep.subr.mxu0 0.0
    %1350 = vmatpush1.msra.mxu0 0.0
    %1351 = vmatprep.subr.mxu0 0.0
    %1352 = vmatpush1.msra.mxu0 0.0
    %1353 = vmatprep.subr.mxu0 0.0
    %1354 = vmatpush1.msra.mxu0 0.0
    %1355 = vmatprep.subr.mxu0 0.0
    %1356 = vmatpush1.msra.mxu0 0.0
    %1357 = vmatprep.subr.mxu0 0.0
    %1358 = vmatpush1.msra.mxu0 0.0
    %1359 = vmatprep.subr.mxu0 0.0
    %1360 = vmatpush1.msra.mxu0 0.0
    %1361 = vmatprep.subr.mxu0 0.0
    %1362 = vmatpush1.msra.mxu0 0.0
    %1363 = vmatprep.subr.mxu0 0.0
    %1364 = vmatpush1.msra.mxu0 0.0
    %1365 = vmatprep.subr.mxu0 0.0
    %1366 = vmatpush1.msra.mxu0 0.0
    %1367 = vmatprep.subr.mxu0 0.0
    %1368 = vmatpush1.msra.mxu0 0.0
    %1369 = vmatprep.subr.mxu0 0.0
    %1370 = vmatpush1.msra.mxu0 0.0
    %1371 = vmatprep.subr.mxu0 0.0
    %1372 = vmatpush1.msra.mxu0 0.0
    %1373 = vmatprep.subr.mxu0 0.0
    %1374 = vmatpush1.msra.mxu0 0.0
    %1375 = vmatprep.subr.mxu0 0.0
    %1376 = vmatpush1.msra.mxu0 0.0
    %1377 = vmatprep.subr.mxu0 0.0
    %1378 = vmatpush1.msra.mxu0 0.0
    %1379 = vmatprep.subr.mxu0 0.0
    %1380 = vmatpush1.msra.mxu0 0.0
    %1381 = vmatprep.subr.mxu0 0.0
    %1382 = vmatpush1.msra.mxu0 0.0
    %1383 = vmatprep.mubr.f32.mxu0 0.0
    %1384 = vmatmul.mubr.f32.gmra.mrb[0].mxu0 %v1311
    %v1385 = vpop.f32.mrb[0].mxu0
    %v1386 = vadd.f32 0.0, %v1385
    %v1387 = vpop.f32.mrb[0].mxu0
    %1388 = vmatprep.mubr.f32.mxu0 0.0
    %1389 = vmatmul.mubr.f32.gmra.mrb[0].mxu0 %v1313
    %v1390 = vpop.f32.mrb[0].mxu0
    %v1391 = vadd.f32 0.0, %v1390
    %v1392 = vpop.f32.mrb[0].mxu0
    %1393 = vmatprep.mubr.f32.mxu0 0.0
    %1394 = vmatmul.mubr.f32.gmra.mrb[0].mxu0 %v1315
    %v1395 = vpop.f32.mrb[0].mxu0
    %v1396 = vadd.f32 0.0, %v1395
    %v1397 = vpop.f32.mrb[0].mxu0
    %1398 = vmatprep.mubr.f32.mxu0 0.0
    %1399 = vmatmul.mubr.f32.gmra.mrb[0].mxu0 %v1317
    %v1400 = vpop.f32.mrb[0].mxu0
    %v1401 = vadd.f32 0.0, %v1400
    %v1402 = vpop.f32.mrb[0].mxu0
    %1403 = vdwg.mxu0
    %v1404 = vadd.f32 %v1295, %v1386
    %v1405 = vadd.f32 %v1296, %v1391
    %v1406 = vadd.f32 %v1297, %v1396
    %v1407 = vadd.f32 %v1298, %v1401
    %v1408 = vrot.slane %v979, 4
    %v1409 = vrot.slane %v980, 4
    %v1410 = vsel %vm86, %v1408, %v1409
    %v1411 = vrot.slane %v981, 4
    %v1412 = vsel %vm86, %v1409, %v1411
    %v1413 = vrot.slane %v982, 4
    %v1414 = vrot.slane %v983, 4
    %v1415 = vsel %vm86, %v1413, %v1414
    %v1416 = vrot.slane %v984, 4
    %v1417 = vsel %vm86, %v1414, %v1416
    %s1418 = scalar_lea.vmem [#allocation3], 32
    %v1419 = vld [vmem:[%s1418] sm:$0xff]
    %v1420 = vsel %vm629, %v1410, 0
    %v1422 = vsel %vm629, %v1412, 0
    %v1424 = vsel %vm629, %v1415, 0
    %v1426 = vsel %vm629, %v1417, 0
    %1428 = vmatprep.subr.mxu0 0.0
    %1429 = vmatpush1.msra.mxu0 %v1419
    %1430 = vmatprep.subr.mxu0 0.0
    %1431 = vmatpush1.msra.mxu0 0.0
    %1432 = vmatprep.subr.mxu0 0.0
    %1433 = vmatpush1.msra.mxu0 0.0
    %1434 = vmatprep.subr.mxu0 0.0
    %1435 = vmatpush1.msra.mxu0 0.0
    %1436 = vmatprep.subr.mxu0 0.0
    %1437 = vmatpush1.msra.mxu0 0.0
    %1438 = vmatprep.subr.mxu0 0.0
    %1439 = vmatpush1.msra.mxu0 0.0
    %1440 = vmatprep.subr.mxu0 0.0
    %1441 = vmatpush1.msra.mxu0 0.0
    %1442 = vmatprep.subr.mxu0 0.0
    %1443 = vmatpush1.msra.mxu0 0.0
    %1444 = vmatprep.subr.mxu0 0.0
    %1445 = vmatpush1.msra.mxu0 0.0
    %1446 = vmatprep.subr.mxu0 0.0
    %1447 = vmatpush1.msra.mxu0 0.0
    %1448 = vmatprep.subr.mxu0 0.0
    %1449 = vmatpush1.msra.mxu0 0.0
    %1450 = vmatprep.subr.mxu0 0.0
    %1451 = vmatpush1.msra.mxu0 0.0
    %1452 = vmatprep.subr.mxu0 0.0
    %1453 = vmatpush1.msra.mxu0 0.0
    %1454 = vmatprep.subr.mxu0 0.0
    %1455 = vmatpush1.msra.mxu0 0.0
    %1456 = vmatprep.subr.mxu0 0.0
    %1457 = vmatpush1.msra.mxu0 0.0
    %1458 = vmatprep.subr.mxu0 0.0
    %1459 = vmatpush1.msra.mxu0 0.0
    %1460 = vmatprep.subr.mxu0 0.0
    %1461 = vmatpush1.msra.mxu0 0.0
    %1462 = vmatprep.subr.mxu0 0.0
    %1463 = vmatpush1.msra.mxu0 0.0
    %1464 = vmatprep.subr.mxu0 0.0
    %1465 = vmatpush1.msra.mxu0 0.0
    %1466 = vmatprep.subr.mxu0 0.0
    %1467 = vmatpush1.msra.mxu0 0.0
    %1468 = vmatprep.subr.mxu0 0.0
    %1469 = vmatpush1.msra.mxu0 0.0
    %1470 = vmatprep.subr.mxu0 0.0
    %1471 = vmatpush1.msra.mxu0 0.0
    %1472 = vmatprep.subr.mxu0 0.0
    %1473 = vmatpush1.msra.mxu0 0.0
    %1474 = vmatprep.subr.mxu0 0.0
    %1475 = vmatpush1.msra.mxu0 0.0
    %1476 = vmatprep.subr.mxu0 0.0
    %1477 = vmatpush1.msra.mxu0 0.0
    %1478 = vmatprep.subr.mxu0 0.0
    %1479 = vmatpush1.msra.mxu0 0.0
    %1480 = vmatprep.subr.mxu0 0.0
    %1481 = vmatpush1.msra.mxu0 0.0
    %1482 = vmatprep.subr.mxu0 0.0
    %1483 = vmatpush1.msra.mxu0 0.0
    %1484 = vmatprep.subr.mxu0 0.0
    %1485 = vmatpush1.msra.mxu0 0.0
    %1486 = vmatprep.subr.mxu0 0.0
    %1487 = vmatpush1.msra.mxu0 0.0
    %1488 = vmatprep.subr.mxu0 0.0
    %1489 = vmatpush1.msra.mxu0 0.0
    %1490 = vmatprep.subr.mxu0 0.0
    %1491 = vmatpush1.msra.mxu0 0.0
    %1492 = vmatprep.mubr.f32.mxu0 0.0
    %1493 = vmatmul.mubr.f32.gmra.mrb[0].mxu0 %v1420
    %v1494 = vpop.f32.mrb[0].mxu0
    %v1495 = vadd.f32 0.0, %v1494
    %v1496 = vpop.f32.mrb[0].mxu0
    %1497 = vmatprep.mubr.f32.mxu0 0.0
    %1498 = vmatmul.mubr.f32.gmra.mrb[0].mxu0 %v1422
    %v1499 = vpop.f32.mrb[0].mxu0
    %v1500 = vadd.f32 0.0, %v1499
    %v1501 = vpop.f32.mrb[0].mxu0
    %1502 = vmatprep.mubr.f32.mxu0 0.0
    %1503 = vmatmul.mubr.f32.gmra.mrb[0].mxu0 %v1424
    %v1504 = vpop.f32.mrb[0].mxu0
    %v1505 = vadd.f32 0.0, %v1504
    %v1506 = vpop.f32.mrb[0].mxu0
    %1507 = vmatprep.mubr.f32.mxu0 0.0
    %1508 = vmatmul.mubr.f32.gmra.mrb[0].mxu0 %v1426
    %v1509 = vpop.f32.mrb[0].mxu0
    %v1510 = vadd.f32 0.0, %v1509
    %v1511 = vpop.f32.mrb[0].mxu0
    %1512 = vdwg.mxu0
    %v1513 = vadd.f32 %v1404, %v1495
    %v1514 = vadd.f32 %v1405, %v1500
    %v1515 = vadd.f32 %v1406, %v1505
    %v1516 = vadd.f32 %v1407, %v1510
    %v1517 = vlaneseq
    %v1518 = vshrl.u32 %v1517, 7
    %v1519 = vsub.s32 0, %v1518
    %v1520 = vrot.slane %v41, %v1519
    %v1521 = vadd.f32 %v1513, %v1520
    %v1522 = vadd.f32 %v1514, %v1520
    %v1523 = vadd.f32 %v1515, %v1520
    %v1524 = vadd.f32 %v1516, %v1520
    %v1525 = vsel %vm629, %v1521, 0.0
    %v1526 = vsel %vm629, %v1522, 0.0
    %v1527 = vadd.f32 %v1525, %v1526
    %v1528 = vrot.slane %v1527, 4
    %v1529 = vadd.f32 %v1527, %v1528
    %v1530 = vrot.slane %v1529, 2
    %v1531 = vadd.f32 %v1529, %v1530
    %v1532 = vrot.slane %v1531, 1
    %v1533 = vadd.f32 %v1531, %v1532
    %v1534 = vsel %vm629, %v1523, 0.0
    %v1535 = vsel %vm629, %v1524, 0.0
    %v1536 = vadd.f32 %v1534, %v1535
    %v1537 = vrot.slane %v1536, 4
    %v1538 = vadd.f32 %v1536, %v1537
    %v1539 = vrot.slane %v1538, 2
    %v1540 = vadd.f32 %v1538, %v1539
    %v1541 = vrot.slane %v1540, 1
    %v1542 = vadd.f32 %v1540, %v1541
    %v1543 = vmul.f32 %v1521, %v1521
    %v1544 = vmul.f32 %v1522, %v1522
    %v1545 = vmul.f32 %v1523, %v1523
    %v1546 = vmul.f32 %v1524, %v1524
    %v1547 = vsel %vm629, %v1543, 0.0
    %v1548 = vsel %vm629, %v1544, 0.0
    %v1549 = vadd.f32 %v1547, %v1548
    %v1550 = vrot.slane %v1549, 4
    %v1551 = vadd.f32 %v1549, %v1550
    %v1552 = vrot.slane %v1551, 2
    %v1553 = vadd.f32 %v1551, %v1552
    %v1554 = vrot.slane %v1553, 1
    %v1555 = vadd.f32 %v1553, %v1554
    %v1556 = vsel %vm629, %v1545, 0.0
    %v1557 = vsel %vm629, %v1546, 0.0
    %v1558 = vadd.f32 %v1556, %v1557
    %v1559 = vrot.slane %v1558, 4
    %v1560 = vadd.f32 %v1558, %v1559
    %v1561 = vrot.slane %v1560, 2
    %v1562 = vadd.f32 %v1560, %v1561
    %v1563 = vrot.slane %v1562, 1
    %v1564 = vadd.f32 %v1562, %v1563
    %v1567 = vsel %vm672, %v1542, %v1533
    %v1568 = vsel %vm629, %v1567, 0
    %1570 = vmatprep.subr.mxu0 0.0
    %1571 = vmatpush1.msra.mxu0 %v37
    %1572 = vmatprep.subr.mxu0 0.0
    %1573 = vmatpush1.msra.mxu0 0.0
    %1574 = vmatprep.subr.mxu0 0.0
    %1575 = vmatpush1.msra.mxu0 0.0
    %1576 = vmatprep.subr.mxu0 0.0
    %1577 = vmatpush1.msra.mxu0 0.0
    %1578 = vmatprep.subr.mxu0 0.0
    %1579 = vmatpush1.msra.mxu0 0.0
    %1580 = vmatprep.subr.mxu0 0.0
    %1581 = vmatpush1.msra.mxu0 0.0
    %1582 = vmatprep.subr.mxu0 0.0
    %1583 = vmatpush1.msra.mxu0 0.0
    %1584 = vmatprep.subr.mxu0 0.0
    %1585 = vmatpush1.msra.mxu0 0.0
    %1586 = vmatprep.subr.mxu0 0.0
    %1587 = vmatpush1.msra.mxu0 0.0
    %1588 = vmatprep.subr.mxu0 0.0
    %1589 = vmatpush1.msra.mxu0 0.0
    %1590 = vmatprep.subr.mxu0 0.0
    %1591 = vmatpush1.msra.mxu0 0.0
    %1592 = vmatprep.subr.mxu0 0.0
    %1593 = vmatpush1.msra.mxu0 0.0
    %1594 = vmatprep.subr.mxu0 0.0
    %1595 = vmatpush1.msra.mxu0 0.0
    %1596 = vmatprep.subr.mxu0 0.0
    %1597 = vmatpush1.msra.mxu0 0.0
    %1598 = vmatprep.subr.mxu0 0.0
    %1599 = vmatpush1.msra.mxu0 0.0
    %1600 = vmatprep.subr.mxu0 0.0
    %1601 = vmatpush1.msra.mxu0 0.0
    %1602 = vmatprep.subr.mxu0 0.0
    %1603 = vmatpush1.msra.mxu0 0.0
    %1604 = vmatprep.subr.mxu0 0.0
    %1605 = vmatpush1.msra.mxu0 0.0
    %1606 = vmatprep.subr.mxu0 0.0
    %1607 = vmatpush1.msra.mxu0 0.0
    %1608 = vmatprep.subr.mxu0 0.0
    %1609 = vmatpush1.msra.mxu0 0.0
    %1610 = vmatprep.subr.mxu0 0.0
    %1611 = vmatpush1.msra.mxu0 0.0
    %1612 = vmatprep.subr.mxu0 0.0
    %1613 = vmatpush1.msra.mxu0 0.0
    %1614 = vmatprep.subr.mxu0 0.0
    %1615 = vmatpush1.msra.mxu0 0.0
    %1616 = vmatprep.subr.mxu0 0.0
    %1617 = vmatpush1.msra.mxu0 0.0
    %1618 = vmatprep.subr.mxu0 0.0
    %1619 = vmatpush1.msra.mxu0 0.0
    %1620 = vmatprep.subr.mxu0 0.0
    %1621 = vmatpush1.msra.mxu0 0.0
    %1622 = vmatprep.subr.mxu0 0.0
    %1623 = vmatpush1.msra.mxu0 0.0
    %1624 = vmatprep.subr.mxu0 0.0
    %1625 = vmatpush1.msra.mxu0 0.0
    %1626 = vmatprep.subr.mxu0 0.0
    %1627 = vmatpush1.msra.mxu0 0.0
    %1628 = vmatprep.subr.mxu0 0.0
    %1629 = vmatpush1.msra.mxu0 0.0
    %1630 = vmatprep.subr.mxu0 0.0
    %1631 = vmatpush1.msra.mxu0 0.0
    %1632 = vmatprep.subr.mxu0 0.0
    %1633 = vmatpush1.msra.mxu0 0.0
    %1634 = vmatprep.mubr.f32.mxu0 0.0
    %1635 = vmatmul.mubr.f32.gmra.mrb[0].mxu0 %v1568
    %v1636 = vpop.f32.mrb[0].mxu0
    %v1637 = vadd.f32 0.0, %v1636
    %v1638 = vpop.f32.mrb[0].mxu0
    %1639 = vdwg.mxu0
    %v1642 = vsel %vm672, %v1564, %v1555
    %v1643 = vsel %vm629, %v1642, 0
    %1645 = vmatprep.subr.mxu0 0.0
    %1646 = vmatpush1.msra.mxu0 %v37
    %1647 = vmatprep.subr.mxu0 0.0
    %1648 = vmatpush1.msra.mxu0 0.0
    %1649 = vmatprep.subr.mxu0 0.0
    %1650 = vmatpush1.msra.mxu0 0.0
    %1651 = vmatprep.subr.mxu0 0.0
    %1652 = vmatpush1.msra.mxu0 0.0
    %1653 = vmatprep.subr.mxu0 0.0
    %1654 = vmatpush1.msra.mxu0 0.0
    %1655 = vmatprep.subr.mxu0 0.0
    %1656 = vmatpush1.msra.mxu0 0.0
    %1657 = vmatprep.subr.mxu0 0.0
    %1658 = vmatpush1.msra.mxu0 0.0
    %1659 = vmatprep.subr.mxu0 0.0
    %1660 = vmatpush1.msra.mxu0 0.0
    %1661 = vmatprep.subr.mxu0 0.0
    %1662 = vmatpush1.msra.mxu0 0.0
    %1663 = vmatprep.subr.mxu0 0.0
    %1664 = vmatpush1.msra.mxu0 0.0
    %1665 = vmatprep.subr.mxu0 0.0
    %1666 = vmatpush1.msra.mxu0 0.0
    %1667 = vmatprep.subr.mxu0 0.0
    %1668 = vmatpush1.msra.mxu0 0.0
    %1669 = vmatprep.subr.mxu0 0.0
    %1670 = vmatpush1.msra.mxu0 0.0
    %1671 = vmatprep.subr.mxu0 0.0
    %1672 = vmatpush1.msra.mxu0 0.0
    %1673 = vmatprep.subr.mxu0 0.0
    %1674 = vmatpush1.msra.mxu0 0.0
    %1675 = vmatprep.subr.mxu0 0.0
    %1676 = vmatpush1.msra.mxu0 0.0
    %1677 = vmatprep.subr.mxu0 0.0
    %1678 = vmatpush1.msra.mxu0 0.0
    %1679 = vmatprep.subr.mxu0 0.0
    %1680 = vmatpush1.msra.mxu0 0.0
    %1681 = vmatprep.subr.mxu0 0.0
    %1682 = vmatpush1.msra.mxu0 0.0
    %1683 = vmatprep.subr.mxu0 0.0
    %1684 = vmatpush1.msra.mxu0 0.0
    %1685 = vmatprep.subr.mxu0 0.0
    %1686 = vmatpush1.msra.mxu0 0.0
    %1687 = vmatprep.subr.mxu0 0.0
    %1688 = vmatpush1.msra.mxu0 0.0
    %1689 = vmatprep.subr.mxu0 0.0
    %1690 = vmatpush1.msra.mxu0 0.0
    %1691 = vmatprep.subr.mxu0 0.0
    %1692 = vmatpush1.msra.mxu0 0.0
    %1693 = vmatprep.subr.mxu0 0.0
    %1694 = vmatpush1.msra.mxu0 0.0
    %1695 = vmatprep.subr.mxu0 0.0
    %1696 = vmatpush1.msra.mxu0 0.0
    %1697 = vmatprep.subr.mxu0 0.0
    %1698 = vmatpush1.msra.mxu0 0.0
    %1699 = vmatprep.subr.mxu0 0.0
    %1700 = vmatpush1.msra.mxu0 0.0
    %1701 = vmatprep.subr.mxu0 0.0
    %1702 = vmatpush1.msra.mxu0 0.0
    %1703 = vmatprep.subr.mxu0 0.0
    %1704 = vmatpush1.msra.mxu0 0.0
    %1705 = vmatprep.subr.mxu0 0.0
    %1706 = vmatpush1.msra.mxu0 0.0
    %1707 = vmatprep.subr.mxu0 0.0
    %1708 = vmatpush1.msra.mxu0 0.0
    %1709 = vmatprep.mubr.f32.mxu0 0.0
    %1710 = vmatmul.mubr.f32.gmra.mrb[0].mxu0 %v1643
    %v1711 = vpop.f32.mrb[0].mxu0
    %v1712 = vadd.f32 0.0, %v1711
    %v1713 = vpop.f32.mrb[0].mxu0
    %1714 = vdwg.mxu0
    %v1715 = vmul.f32 %v1637, %v1637
    %v1716 = vsub.f32 %v1712, %v1715
    %v1717 = vmax.f32 %v1716, 0.0
    %v1718 = vadd.f32 %v1717, 1e-05
    %v1719 = vrsqrt.pop %v1718
    %v1722 = vunpack.c.l.s4 1966171168
    %v1723 = vunpack.c.0.s8 %v1722
    %v1724 = vlaneseq
    %v1725 = vshrl.u32 %v1724, 7
    %v1726 = vsub.s32 %v1723, %v1725
    %v1727 = vrot.slane %v1637, %v1726
    %v1728 = vcombine.high %v1727, %v1727
    %v1730 = vunpack.c.l.s4 1966171168
    %v1731 = vunpack.c.0.s8 %v1730
    %v1732 = vlaneseq
    %v1733 = vshrl.u32 %v1732, 7
    %v1734 = vsub.s32 %v1731, %v1733
    %v1735 = vrot.slane %v1727, %v1734
    %v1737 = vunpack.c.l.s4 1966171168
    %v1738 = vunpack.c.0.s8 %v1737
    %v1739 = vlaneseq
    %v1740 = vshrl.u32 %v1739, 7
    %v1741 = vsub.s32 %v1738, %v1740
    %v1742 = vrot.slane %v1728, %v1741
    %v1743 = vlaneseq
    %v1744 = vshrl.u32 %v1743, 7
    %v1745 = vsub.s32 0, %v1744
    %v1746 = vrot.slane %v1735, %v1745
    %v1747 = vlaneseq
    %v1748 = vshrl.u32 %v1747, 7
    %v1749 = vsub.s32 0, %v1748
    %v1750 = vrot.slane %v1742, %v1749
    %v1753 = vsub.f32 %v1521, %v1746
    %v1754 = vsub.f32 %v1522, %v1746
    %v1755 = vsub.f32 %v1523, %v1750
    %v1756 = vsub.f32 %v1524, %v1750
    %v1759 = vunpack.c.l.s4 1966171168
    %v1760 = vunpack.c.0.s8 %v1759
    %v1761 = vlaneseq
    %v1762 = vshrl.u32 %v1761, 7
    %v1763 = vsub.s32 %v1760, %v1762
    %v1764 = vrot.slane %v1719, %v1763
    %v1765 = vcombine.high %v1764, %v1764
    %v1767 = vunpack.c.l.s4 1966171168
    %v1768 = vunpack.c.0.s8 %v1767
    %v1769 = vlaneseq
    %v1770 = vshrl.u32 %v1769, 7
    %v1771 = vsub.s32 %v1768, %v1770
    %v1772 = vrot.slane %v1764, %v1771
    %v1774 = vunpack.c.l.s4 1966171168
    %v1775 = vunpack.c.0.s8 %v1774
    %v1776 = vlaneseq
    %v1777 = vshrl.u32 %v1776, 7
    %v1778 = vsub.s32 %v1775, %v1777
    %v1779 = vrot.slane %v1765, %v1778
    %v1780 = vlaneseq
    %v1781 = vshrl.u32 %v1780, 7
    %v1782 = vsub.s32 0, %v1781
    %v1783 = vrot.slane %v1772, %v1782
    %v1784 = vlaneseq
    %v1785 = vshrl.u32 %v1784, 7
    %v1786 = vsub.s32 0, %v1785
    %v1787 = vrot.slane %v1779, %v1786
    %v1790 = vmul.f32 %v1753, %v1783
    %v1791 = vmul.f32 %v1754, %v1783
    %v1792 = vmul.f32 %v1755, %v1787
    %v1793 = vmul.f32 %v1756, %v1787
    %v1794 = vlaneseq
    %v1795 = vshrl.u32 %v1794, 7
    %v1796 = vsub.s32 0, %v1795
    %v1797 = vrot.slane %v42, %v1796
    %v1798 = vmul.f32 %v1790, %v1797
    %v1799 = vmul.f32 %v1791, %v1797
    %v1800 = vmul.f32 %v1792, %v1797
    %v1801 = vmul.f32 %v1793, %v1797
    %v1802 = vlaneseq
    %v1803 = vshrl.u32 %v1802, 7
    %v1804 = vsub.s32 0, %v1803
    %v1805 = vrot.slane %v43, %v1804
    %v1806 = vadd.f32 %v1798, %v1805
    %v1807 = vadd.f32 %v1799, %v1805
    %v1808 = vadd.f32 %v1800, %v1805
    %v1809 = vadd.f32 %v1801, %v1805
    %v1810 = vmin.f32 %v1806, 20.0
    %v1811 = vmin.f32 %v1807, 20.0
    %v1812 = vmin.f32 %v1808, 20.0
    %v1813 = vmin.f32 %v1809, 20.0
    %v1814 = vmul.f32 %v1810, 1.442695
    %v1815 = vpow.pop %v1814
    %v1816 = vmul.f32 %v1811, 1.442695
    %v1817 = vpow.pop %v1816
    %v1818 = vmul.f32 %v1812, 1.442695
    %v1819 = vpow.pop %v1818
    %v1820 = vmul.f32 %v1813, 1.442695
    %v1821 = vpow.pop %v1820
    %v1822 = vadd.f32 %v1815, 2.0
    %v1823 = vadd.f32 %v1817, 2.0
    %v1824 = vadd.f32 %v1819, 2.0
    %v1825 = vadd.f32 %v1821, 2.0
    %v1826 = vmul.f32 %v1815, %v1822
    %v1827 = vmul.f32 %v1817, %v1823
    %v1828 = vmul.f32 %v1819, %v1824
    %v1829 = vmul.f32 %v1821, %v1825
    %v1830 = vmul.f32 %v1806, %v1826
    %v1831 = vmul.f32 %v1807, %v1827
    %v1832 = vmul.f32 %v1808, %v1828
    %v1833 = vmul.f32 %v1809, %v1829
    %v1834 = vadd.f32 %v1826, 2.0
    %v1835 = vadd.f32 %v1827, 2.0
    %v1836 = vadd.f32 %v1828, 2.0
    %v1837 = vadd.f32 %v1829, 2.0
    %v1838 = vrcp.pop %v1834
    %v1839 = vrcp.pop %v1835
    %v1840 = vrcp.pop %v1836
    %v1841 = vrcp.pop %v1837
    %v1842 = vmul.f32 %v1830, %v1838
    %v1843 = vmul.f32 %v1831, %v1839
    %v1844 = vmul.f32 %v1832, %v1840
    %v1845 = vmul.f32 %v1833, %v1841
    %1850 = vrot.lane.b32.xlu0 %v625, 120
    %v1851 = vpop.permute.xlu0 %1850
    %1852 = vrot.lane.b32.xlu0 %v626, 120
    %v1853 = vpop.permute.xlu0 %1852
    %1854 = vrot.lane.b32.xlu0 %v627, 120
    %v1855 = vpop.permute.xlu0 %1854
    %1856 = vrot.lane.b32.xlu0 %v628, 120
    %v1857 = vpop.permute.xlu0 %1856
    %v1862 = vadd.f32 %v1842, %v1851
    %v1863 = vadd.f32 %v1843, %v1853
    %v1864 = vadd.f32 %v1844, %v1855
    %v1865 = vadd.f32 %v1845, %v1857
    %1866 = vst.msk [vmem:[%s6] sm:$0xff] %vm629, %v1862
    %1867 = vst.msk [vmem:[%s6 + $0x8] sm:$0xff] %vm629, %v1863
    %1868 = vst.msk [vmem:[%s6 + $0x10] sm:$0xff] %vm629, %v1864
    %1869 = vst.msk [vmem:[%s6 + $0x18] sm:$0xff] %vm629, %v1865
    // Predicated region
    $region30: #{tpu_custom_call.1} parent=1 // pred_check
      _
    $region31: #{tpu_custom_call.1} parent=1 // pred_check_branch
      %1871 = sbr.rel (0) target = $region33
    $region32: #{tpu_custom_call.1} parent=1 // pred_region
      _
    $region33: #{tpu_custom_call.1} parent=1 // pred_fallthru
      _
    // Predicated region
    $region34: #{tpu_custom_call.1} parent=1 // pred_check
      _
    $region35: #{tpu_custom_call.1} parent=1 // pred_check_branch
      %1873 = sbr.rel (0) target = $region37
    $region36: #{tpu_custom_call.1} parent=1 // pred_region
      _
    $region37: #{tpu_custom_call.1} parent=1 // pred_fallthru
      _
    %1874 = vsyncpa [#allocation4], 1

</llo_original>
